<compile_context>
chip_gen: v6e
topology: v6e:2x2x1
jax: 0.10.0
libtpu: 0.0.40
codegen_flags: <defaults>
</compile_context>

<pallas_src>
import functools

import numpy as np
import jax
import jax.numpy as jnp
from jax.experimental import pallas as pl
from jax.experimental.pallas import tpu as pltpu

LN_EPS = 1e-5  # torch.nn.LayerNorm default


def _round_up(x, m):
    return ((x + m - 1) // m) * m


def _head_selector_t(half, dtype=jnp.float32):
    """(2, 2*half) indicator: row q is 1 on head-q's lanes.

    Built in-kernel from iota so it never has to be DMA'd as a constant.
    """
    F = 2 * half
    qrow = jax.lax.broadcasted_iota(jnp.int32, (2, F), 0)
    fcol = jax.lax.broadcasted_iota(jnp.int32, (2, F), 1)
    return ((fcol >= half).astype(jnp.int32) == qrow).astype(dtype)


def _fused_layernorm(h, half, gamma, beta):
    """Per-head LayerNorm on lane-fused activations [head1 | head2].

    Per-head sums / sums-of-squares go through the MXU (contract the lane axis
    against a 0/1 selector) instead of cross-lane XLU reductions; variance is
    single-pass (E[x^2] - mu^2) and all statistics stay f32.
    """
    selt = _head_selector_t(half)                              # (2, F)
    contract_last = (((1,), (1,)), ((), ()))
    s1 = jax.lax.dot_general(h, selt, contract_last,
                             preferred_element_type=jnp.float32)    # (TB, 2)
    s2 = jax.lax.dot_general(h * h, selt, contract_last,
                             preferred_element_type=jnp.float32)    # (TB, 2)
    inv_n = 1.0 / half
    mu = s1 * inv_n
    var = jnp.maximum(s2 * inv_n - mu * mu, 0.0)
    inv = jax.lax.rsqrt(var + LN_EPS)
    mu_f = jnp.dot(mu, selt, preferred_element_type=jnp.float32)    # broadcast back
    inv_f = jnp.dot(inv, selt, preferred_element_type=jnp.float32)
    return (h - mu_f) * inv_f * gamma + beta


def critic_kernel(s_ref, a_ref, w1s_ref, w1a_ref, w2_ref, wot_ref, vec_ref,
                  q_ref, *, h1, h2):
    F1, F2 = 2 * h1, 2 * h2
    # Packed per-feature vectors: one VMEM operand, static row/lane slices.
    b1, g1, be1 = vec_ref[0:1, :F1], vec_ref[1:2, :F1], vec_ref[2:3, :F1]
    b2, g2, be2 = vec_ref[3:4, :F2], vec_ref[4:5, :F2], vec_ref[5:6, :F2]
    bo = vec_ref[6:8, 0:1]                                        # (2, 1)

    wd = w1s_ref.dtype   # matmul operand dtype (f32 or bf16); accum stays f32

    # Layer 1 (both heads lane-fused).  concat(state, action) is avoided by
    # splitting w1 into a state part and an action part.
    h = (jnp.dot(s_ref[...].astype(wd), w1s_ref[...],
                 preferred_element_type=jnp.float32)
         + jnp.dot(a_ref[...].astype(wd), w1a_ref[...],
                   preferred_element_type=jnp.float32)
         + b1)
    h = jnp.maximum(h, 0.0)
    h = jnp.maximum(_fused_layernorm(h, h1, g1, be1), 0.0)

    # Layer 2: block-diagonal weight keeps the two heads independent.
    h = jnp.dot(h.astype(wd), w2_ref[...],
                preferred_element_type=jnp.float32) + b2
    h = jnp.maximum(h, 0.0)
    h = jnp.maximum(_fused_layernorm(h, h2, g2, be2), 0.0)

    # Output layer computed transposed (contract last dims of both operands) so
    # the store is a lane-dense (2, TB) block instead of a 2-lane masked store.
    q_t = jax.lax.dot_general(wot_ref[...], h.astype(wd),
                              (((1,), (1,)), ((), ())),
                              preferred_element_type=jnp.float32)  # (2, TB)
    q_ref[...] = q_t + bo


def advanced_critic_forward(state, action, fused, *, tile_b=2048):
    """Returns (q1, q2), each of shape (B, 1)."""
    B, S = state.shape
    A = action.shape[1]
    h1, h2 = fused["h1"], fused["h2"]
    F1 = 2 * h1

    # ---- batch tile selection -----------------------------------------------
    # Big tiles amortize the ~0.35us per-grid-step overhead; keep >= 2 grid
    # steps whenever the batch allows so ("parallel",) can split the batch
    # across v7x's two TensorCores.
    tb = max(128, (int(tile_b) // 128) * 128)
    while tb > 128 and B <= tb:
        tb //= 2
    tb = max(128, (tb // 128) * 128)
    Bp = _round_up(B, tb)
    if Bp != B:
        pad = Bp - B
        state = jnp.pad(state, ((0, pad), (0, 0)))
        action = jnp.pad(action, ((0, pad), (0, 0)))
    grid = (Bp // tb,)

    # ---- VMEM budget (double-buffered IO tiles + resident weights + temps) ---
    w_bytes = sum(int(np.prod(fused[k].shape)) * fused[k].dtype.itemsize
                  for k in ("w1s", "w1a", "w2", "wot", "vec"))
    io_bytes = 2 * 4 * tb * (S + A + 2)        # 2-deep buffering of in/out tiles
    tmp_bytes = 12 * 4 * tb * max(F1, 128)     # headroom for live f32 temporaries
    vmem_limit = int(min(64 * 1024 * 1024,
                         max(16 * 1024 * 1024, w_bytes + io_bytes + tmp_bytes)))

    def rep(arr):   # VMEM-resident parameter: identical block every grid step
        return pl.BlockSpec(arr.shape, lambda i: (0, 0))

    kernel = functools.partial(critic_kernel, h1=h1, h2=h2)

    q_t = pl.pallas_call(
        kernel,
        out_shape=jax.ShapeDtypeStruct((2, Bp), jnp.float32),
        grid=grid,
        in_specs=[
            pl.BlockSpec((tb, S), lambda i: (i, 0)),
            pl.BlockSpec((tb, A), lambda i: (i, 0)),
            rep(fused["w1s"]), rep(fused["w1a"]), rep(fused["w2"]),
            rep(fused["wot"]), rep(fused["vec"]),
        ],
        out_specs=pl.BlockSpec((2, tb), lambda i: (0, i)),
        compiler_params=pltpu.CompilerParams(
            dimension_semantics=("parallel",),
            vmem_limit_bytes=vmem_limit),
    )(state, action, fused["w1s"], fused["w1a"], fused["w2"],
      fused["wot"], fused["vec"])

    q1 = q_t[0, :B, None]
    q2 = q_t[1, :B, None]
    return q1, q2


# ----------------------------------------------------------------------------
# Parameter construction / fusion (plain JAX, done once outside the kernel).
# ----------------------------------------------------------------------------

def init_params(key, state_dim, action_dim, hidden_dims=(64, 32)):
    """Per-head parameters matching the module's shapes.

    Linear weights: orthogonal(gain=sqrt(2)) stored as (in, out); bias = 0.
    LayerNorm: weight = 1, bias = 0 (PyTorch defaults).
    """
    in_dim = state_dim + action_dim
    h1, h2 = hidden_dims
    ortho = jax.nn.initializers.orthogonal(scale=np.sqrt(2.0))
    keys = jax.random.split(key, 3)

    def stack2(k, shape):
        k0, k1 = jax.random.split(k)
        return jnp.stack([ortho(k0, shape, jnp.float32),
                          ortho(k1, shape, jnp.float32)], axis=0)

    return {
        "w1": stack2(keys[0], (in_dim, h1)),
        "b1": jnp.zeros((2, 1, h1), jnp.float32),
        "g1": jnp.ones((2, 1, h1), jnp.float32),
        "be1": jnp.zeros((2, 1, h1), jnp.float32),
        "w2": stack2(keys[1], (h1, h2)),
        "b2": jnp.zeros((2, 1, h2), jnp.float32),
        "g2": jnp.ones((2, 1, h2), jnp.float32),
        "be2": jnp.zeros((2, 1, h2), jnp.float32),
        "wo": stack2(keys[2], (h2, 1)),
        "bo": jnp.zeros((2, 1, 1), jnp.float32),
    }


def _block_diag(a, b):
    za = jnp.zeros((a.shape[0], b.shape[1]), a.dtype)
    zb = jnp.zeros((b.shape[0], a.shape[1]), b.dtype)
    return jnp.concatenate(
        [jnp.concatenate([a, za], axis=1),
         jnp.concatenate([zb, b], axis=1)], axis=0)


def fuse_params(params, state_dim, matmul_dtype=jnp.float32):
    """Fuse the two Q-heads into lane-concatenated / block-diagonal weights.

    matmul_dtype=jnp.bfloat16 puts the MXU on its native bf16 path (recommended
    on v5e); accumulation and LayerNorm statistics stay f32 inside the kernel.
    """
    h1 = params["w1"].shape[-1]
    h2 = params["w2"].shape[-1]
    F1, F2 = 2 * h1, 2 * h2
    max_f = max(F1, F2, 128)

    w1f = jnp.concatenate([params["w1"][0], params["w1"][1]], axis=1)   # (in, 2*h1)
    cat = lambda p: jnp.concatenate([p[0, 0], p[1, 0]], axis=-1)        # (2*h,)

    # Pack the seven small per-feature vectors into one (8, max_f) operand.
    vec = jnp.zeros((8, max_f), jnp.float32)
    vec = vec.at[0, :F1].set(cat(params["b1"]))
    vec = vec.at[1, :F1].set(cat(params["g1"]))
    vec = vec.at[2, :F1].set(cat(params["be1"]))
    vec = vec.at[3, :F2].set(cat(params["b2"]))
    vec = vec.at[4, :F2].set(cat(params["g2"]))
    vec = vec.at[5, :F2].set(cat(params["be2"]))
    vec = vec.at[6, 0].set(params["bo"][0, 0, 0])
    vec = vec.at[7, 0].set(params["bo"][1, 0, 0])

    return {
        "w1s": w1f[:state_dim].astype(matmul_dtype),                    # (S, 2*h1)
        "w1a": w1f[state_dim:].astype(matmul_dtype),                    # (A, 2*h1)
        "w2": _block_diag(params["w2"][0], params["w2"][1]).astype(matmul_dtype),
        "wot": _block_diag(params["wo"][0],
                           params["wo"][1]).T.astype(matmul_dtype),     # (2, 2*h2)
        "vec": vec,
        "h1": h1, "h2": h2,
    }


# ----------------------------------------------------------------------------
# Pure-JAX reference of the PyTorch forward (per-head, two-pass LayerNorm).
# ----------------------------------------------------------------------------

def _layernorm_ref(h, gamma, beta):
    mu = jnp.mean(h, axis=-1, keepdims=True)
    var = jnp.mean((h - mu) ** 2, axis=-1, keepdims=True)
    return (h - mu) * jax.lax.rsqrt(var + LN_EPS) * gamma + beta


def reference_forward(state, action, params):
    x = jnp.concatenate([state, action], axis=1)
    outs = []
    for qi in range(2):
        h = jnp.maximum(x @ params["w1"][qi] + params["b1"][qi], 0.0)
        h = jnp.maximum(_layernorm_ref(h, params["g1"][qi], params["be1"][qi]), 0.0)
        h = jnp.maximum(h @ params["w2"][qi] + params["b2"][qi], 0.0)
        h = jnp.maximum(_layernorm_ref(h, params["g2"][qi], params["be2"][qi]), 0.0)
        outs.append(h @ params["wo"][qi] + params["bo"][qi])
    return outs[0], outs[1]


if __name__ == "__main__":
    key = jax.random.PRNGKey(0)
    k_param, k_state, k_action = jax.random.split(key, 3)

    batch, state_dim, action_dim = 256, 12, 4
    hidden = (64, 32)   # fused widths 128 / 64 -> lane-aligned matmuls
    params = init_params(k_param, state_dim, action_dim, hidden_dims=hidden)
    fused = fuse_params(params, state_dim)          # f32 weights -> tight check

    state = jax.random.normal(k_state, (batch, state_dim), jnp.float32)
    action = jax.random.normal(k_action, (batch, action_dim), jnp.float32)

    # Default tile_b=2048 auto-shrinks to 128 for this small batch -> grid of 2
    # (exercises the pipelined grid and the v7x two-TensorCore split).
    q1, q2 = advanced_critic_forward(state, action, fused)
    jax.block_until_ready((q1, q2))

    r1, r2 = reference_forward(state, action, params)
    np.testing.assert_allclose(np.asarray(q1), np.asarray(r1), rtol=1e-4, atol=1e-4)
    np.testing.assert_allclose(np.asarray(q2), np.asarray(r2), rtol=1e-4, atol=1e-4)

    print("KERNEL_OK")
</pallas_src>

<mosaic_0001>
module attributes {stable_mosaic.version = 11 : i64} {
  func.func @critic_kernel(%arg0: i32, %arg1: memref<128x12xf32, #tpu.memory_space<vmem>>, %arg2: memref<128x4xf32, #tpu.memory_space<vmem>>, %arg3: memref<12x128xf32, #tpu.memory_space<vmem>>, %arg4: memref<4x128xf32, #tpu.memory_space<vmem>>, %arg5: memref<128x64xf32, #tpu.memory_space<vmem>>, %arg6: memref<2x64xf32, #tpu.memory_space<vmem>>, %arg7: memref<8x128xf32, #tpu.memory_space<vmem>>, %arg8: memref<2x128xf32, #tpu.memory_space<vmem>>) attributes {dimension_semantics = [#tpu.dimension_semantics<parallel>], iteration_bounds = array<i64: 2>, scalar_prefetch = 0 : i64, scratch_operands = 0 : i64, tpu.core_type = #tpu.core_type<tc>, window_params = [{transform_indices = @transform_0, window_bounds = array<i64: 128, 12>}, {transform_indices = @transform_1, window_bounds = array<i64: 128, 4>}, {pipeline_mode = #tpu.pipeline_mode<synchronous>, transform_indices = @transform_2, window_bounds = array<i64: 12, 128>}, {pipeline_mode = #tpu.pipeline_mode<synchronous>, transform_indices = @transform_3, window_bounds = array<i64: 4, 128>}, {pipeline_mode = #tpu.pipeline_mode<synchronous>, transform_indices = @transform_4, window_bounds = array<i64: 128, 64>}, {pipeline_mode = #tpu.pipeline_mode<synchronous>, transform_indices = @transform_5, window_bounds = array<i64: 2, 64>}, {pipeline_mode = #tpu.pipeline_mode<synchronous>, transform_indices = @transform_6, window_bounds = array<i64: 8, 128>}, {transform_indices = @transform_7, window_bounds = array<i64: 2, 128>}]} {
    %c0 = arith.constant 0 : index
    %c0_0 = arith.constant 0 : index
    %0 = vector.load %arg7[%c0, %c0_0] : memref<8x128xf32, #tpu.memory_space<vmem>>, vector<1x128xf32>
    %c1 = arith.constant 1 : index
    %c0_1 = arith.constant 0 : index
    %1 = vector.load %arg7[%c1, %c0_1] : memref<8x128xf32, #tpu.memory_space<vmem>>, vector<1x128xf32>
    %c2 = arith.constant 2 : index
    %c0_2 = arith.constant 0 : index
    %2 = vector.load %arg7[%c2, %c0_2] : memref<8x128xf32, #tpu.memory_space<vmem>>, vector<1x128xf32>
    %c3 = arith.constant 3 : index
    %c0_3 = arith.constant 0 : index
    %3 = vector.load %arg7[%c3, %c0_3] : memref<8x128xf32, #tpu.memory_space<vmem>>, vector<1x64xf32>
    %c4 = arith.constant 4 : index
    %c0_4 = arith.constant 0 : index
    %4 = vector.load %arg7[%c4, %c0_4] : memref<8x128xf32, #tpu.memory_space<vmem>>, vector<1x64xf32>
    %c5 = arith.constant 5 : index
    %c0_5 = arith.constant 0 : index
    %5 = vector.load %arg7[%c5, %c0_5] : memref<8x128xf32, #tpu.memory_space<vmem>>, vector<1x64xf32>
    %c6 = arith.constant 6 : index
    %c0_6 = arith.constant 0 : index
    %6 = vector.load %arg7[%c6, %c0_6] : memref<8x128xf32, #tpu.memory_space<vmem>>, vector<2x1xf32>
    %c0_7 = arith.constant 0 : index
    %c0_8 = arith.constant 0 : index
    %7 = vector.load %arg1[%c0_7, %c0_8] : memref<128x12xf32, #tpu.memory_space<vmem>>, vector<128x12xf32>
    %c0_9 = arith.constant 0 : index
    %c0_10 = arith.constant 0 : index
    %8 = vector.load %arg3[%c0_9, %c0_10] : memref<12x128xf32, #tpu.memory_space<vmem>>, vector<12x128xf32>
    %cst = arith.constant dense<0.000000e+00> : vector<128x128xf32>
    %9 = tpu.matmul %7, %8, %cst {dimension_numbers = #tpu.dot_dimension_numbers<[1], [0], [0], [1], [0, 0, 1, 1], [], []>} : vector<128x12xf32>, vector<12x128xf32>, vector<128x128xf32> -> vector<128x128xf32>
    %c0_11 = arith.constant 0 : index
    %c0_12 = arith.constant 0 : index
    %10 = vector.load %arg2[%c0_11, %c0_12] : memref<128x4xf32, #tpu.memory_space<vmem>>, vector<128x4xf32>
    %c0_13 = arith.constant 0 : index
    %c0_14 = arith.constant 0 : index
    %11 = vector.load %arg4[%c0_13, %c0_14] : memref<4x128xf32, #tpu.memory_space<vmem>>, vector<4x128xf32>
    %cst_15 = arith.constant dense<0.000000e+00> : vector<128x128xf32>
    %12 = tpu.matmul %10, %11, %cst_15 {dimension_numbers = #tpu.dot_dimension_numbers<[1], [0], [0], [1], [0, 0, 1, 1], [], []>} : vector<128x4xf32>, vector<4x128xf32>, vector<128x128xf32> -> vector<128x128xf32>
    %13 = arith.addf %9, %12 : vector<128x128xf32>
    %14 = vector.broadcast %0 : vector<1x128xf32> to vector<128x128xf32>
    %15 = arith.addf %13, %14 : vector<128x128xf32>
    %cst_16 = arith.constant 0.000000e+00 : f32
    %16 = vector.broadcast %cst_16 : f32 to vector<128x128xf32>
    %17 = arith.maximumf %15, %16 : vector<128x128xf32>
    %18 = tpu.iota {dimensions = array<i32: 0>} : vector<2x128xi32>
    %19 = tpu.iota {dimensions = array<i32: 1>} : vector<2x128xi32>
    %c64_i32 = arith.constant 64 : i32
    %20 = vector.broadcast %c64_i32 : i32 to vector<2x128xi32>
    %21 = arith.cmpi sge, %19, %20 : vector<2x128xi32>
    %22 = arith.extui %21 : vector<2x128xi1> to vector<2x128xi32>
    %23 = arith.cmpi eq, %22, %18 : vector<2x128xi32>
    %24 = arith.extui %23 : vector<2x128xi1> to vector<2x128xi32>
    %25 = arith.sitofp %24 : vector<2x128xi32> to vector<2x128xf32>
    %cst_17 = arith.constant dense<0.000000e+00> : vector<128x2xf32>
    %26 = tpu.matmul %17, %25, %cst_17 {dimension_numbers = #tpu.dot_dimension_numbers<[1], [1], [0], [0], [0, 0, 1, 0], [], []>} : vector<128x128xf32>, vector<2x128xf32>, vector<128x2xf32> -> vector<128x2xf32>
    %27 = arith.mulf %17, %17 : vector<128x128xf32>
    %cst_18 = arith.constant dense<0.000000e+00> : vector<128x2xf32>
    %28 = tpu.matmul %27, %25, %cst_18 {dimension_numbers = #tpu.dot_dimension_numbers<[1], [1], [0], [0], [0, 0, 1, 0], [], []>} : vector<128x128xf32>, vector<2x128xf32>, vector<128x2xf32> -> vector<128x2xf32>
    %cst_19 = arith.constant 1.562500e-02 : f32
    %29 = vector.broadcast %cst_19 : f32 to vector<128x2xf32>
    %30 = arith.mulf %26, %29 : vector<128x2xf32>
    %cst_20 = arith.constant 1.562500e-02 : f32
    %31 = vector.broadcast %cst_20 : f32 to vector<128x2xf32>
    %32 = arith.mulf %28, %31 : vector<128x2xf32>
    %33 = arith.mulf %30, %30 : vector<128x2xf32>
    %34 = arith.subf %32, %33 : vector<128x2xf32>
    %cst_21 = arith.constant 0.000000e+00 : f32
    %35 = vector.broadcast %cst_21 : f32 to vector<128x2xf32>
    %36 = arith.maximumf %34, %35 : vector<128x2xf32>
    %cst_22 = arith.constant 9.99999974E-6 : f32
    %37 = vector.broadcast %cst_22 : f32 to vector<128x2xf32>
    %38 = arith.addf %36, %37 : vector<128x2xf32>
    %39 = math.rsqrt %38 : vector<128x2xf32>
    %cst_23 = arith.constant dense<0.000000e+00> : vector<128x128xf32>
    %40 = tpu.matmul %30, %25, %cst_23 {dimension_numbers = #tpu.dot_dimension_numbers<[1], [0], [0], [1], [0, 0, 1, 1], [], []>} : vector<128x2xf32>, vector<2x128xf32>, vector<128x128xf32> -> vector<128x128xf32>
    %cst_24 = arith.constant dense<0.000000e+00> : vector<128x128xf32>
    %41 = tpu.matmul %39, %25, %cst_24 {dimension_numbers = #tpu.dot_dimension_numbers<[1], [0], [0], [1], [0, 0, 1, 1], [], []>} : vector<128x2xf32>, vector<2x128xf32>, vector<128x128xf32> -> vector<128x128xf32>
    %42 = arith.subf %17, %40 : vector<128x128xf32>
    %43 = arith.mulf %42, %41 : vector<128x128xf32>
    %44 = vector.broadcast %1 : vector<1x128xf32> to vector<128x128xf32>
    %45 = arith.mulf %43, %44 : vector<128x128xf32>
    %46 = vector.broadcast %2 : vector<1x128xf32> to vector<128x128xf32>
    %47 = arith.addf %45, %46 : vector<128x128xf32>
    %cst_25 = arith.constant 0.000000e+00 : f32
    %48 = vector.broadcast %cst_25 : f32 to vector<128x128xf32>
    %49 = arith.maximumf %47, %48 : vector<128x128xf32>
    %c0_26 = arith.constant 0 : index
    %c0_27 = arith.constant 0 : index
    %50 = vector.load %arg5[%c0_26, %c0_27] : memref<128x64xf32, #tpu.memory_space<vmem>>, vector<128x64xf32>
    %cst_28 = arith.constant dense<0.000000e+00> : vector<128x64xf32>
    %51 = tpu.matmul %49, %50, %cst_28 {dimension_numbers = #tpu.dot_dimension_numbers<[1], [0], [0], [1], [0, 0, 1, 1], [], []>} : vector<128x128xf32>, vector<128x64xf32>, vector<128x64xf32> -> vector<128x64xf32>
    %52 = vector.broadcast %3 : vector<1x64xf32> to vector<128x64xf32>
    %53 = arith.addf %51, %52 : vector<128x64xf32>
    %cst_29 = arith.constant 0.000000e+00 : f32
    %54 = vector.broadcast %cst_29 : f32 to vector<128x64xf32>
    %55 = arith.maximumf %53, %54 : vector<128x64xf32>
    %56 = tpu.iota {dimensions = array<i32: 0>} : vector<2x64xi32>
    %57 = tpu.iota {dimensions = array<i32: 1>} : vector<2x64xi32>
    %c32_i32 = arith.constant 32 : i32
    %58 = vector.broadcast %c32_i32 : i32 to vector<2x64xi32>
    %59 = arith.cmpi sge, %57, %58 : vector<2x64xi32>
    %60 = arith.extui %59 : vector<2x64xi1> to vector<2x64xi32>
    %61 = arith.cmpi eq, %60, %56 : vector<2x64xi32>
    %62 = arith.extui %61 : vector<2x64xi1> to vector<2x64xi32>
    %63 = arith.sitofp %62 : vector<2x64xi32> to vector<2x64xf32>
    %cst_30 = arith.constant dense<0.000000e+00> : vector<128x2xf32>
    %64 = tpu.matmul %55, %63, %cst_30 {dimension_numbers = #tpu.dot_dimension_numbers<[1], [1], [0], [0], [0, 0, 1, 0], [], []>} : vector<128x64xf32>, vector<2x64xf32>, vector<128x2xf32> -> vector<128x2xf32>
    %65 = arith.mulf %55, %55 : vector<128x64xf32>
    %cst_31 = arith.constant dense<0.000000e+00> : vector<128x2xf32>
    %66 = tpu.matmul %65, %63, %cst_31 {dimension_numbers = #tpu.dot_dimension_numbers<[1], [1], [0], [0], [0, 0, 1, 0], [], []>} : vector<128x64xf32>, vector<2x64xf32>, vector<128x2xf32> -> vector<128x2xf32>
    %cst_32 = arith.constant 3.125000e-02 : f32
    %67 = vector.broadcast %cst_32 : f32 to vector<128x2xf32>
    %68 = arith.mulf %64, %67 : vector<128x2xf32>
    %cst_33 = arith.constant 3.125000e-02 : f32
    %69 = vector.broadcast %cst_33 : f32 to vector<128x2xf32>
    %70 = arith.mulf %66, %69 : vector<128x2xf32>
    %71 = arith.mulf %68, %68 : vector<128x2xf32>
    %72 = arith.subf %70, %71 : vector<128x2xf32>
    %cst_34 = arith.constant 0.000000e+00 : f32
    %73 = vector.broadcast %cst_34 : f32 to vector<128x2xf32>
    %74 = arith.maximumf %72, %73 : vector<128x2xf32>
    %cst_35 = arith.constant 9.99999974E-6 : f32
    %75 = vector.broadcast %cst_35 : f32 to vector<128x2xf32>
    %76 = arith.addf %74, %75 : vector<128x2xf32>
    %77 = math.rsqrt %76 : vector<128x2xf32>
    %cst_36 = arith.constant dense<0.000000e+00> : vector<128x64xf32>
    %78 = tpu.matmul %68, %63, %cst_36 {dimension_numbers = #tpu.dot_dimension_numbers<[1], [0], [0], [1], [0, 0, 1, 1], [], []>} : vector<128x2xf32>, vector<2x64xf32>, vector<128x64xf32> -> vector<128x64xf32>
    %cst_37 = arith.constant dense<0.000000e+00> : vector<128x64xf32>
    %79 = tpu.matmul %77, %63, %cst_37 {dimension_numbers = #tpu.dot_dimension_numbers<[1], [0], [0], [1], [0, 0, 1, 1], [], []>} : vector<128x2xf32>, vector<2x64xf32>, vector<128x64xf32> -> vector<128x64xf32>
    %80 = arith.subf %55, %78 : vector<128x64xf32>
    %81 = arith.mulf %80, %79 : vector<128x64xf32>
    %82 = vector.broadcast %4 : vector<1x64xf32> to vector<128x64xf32>
    %83 = arith.mulf %81, %82 : vector<128x64xf32>
    %84 = vector.broadcast %5 : vector<1x64xf32> to vector<128x64xf32>
    %85 = arith.addf %83, %84 : vector<128x64xf32>
    %cst_38 = arith.constant 0.000000e+00 : f32
    %86 = vector.broadcast %cst_38 : f32 to vector<128x64xf32>
    %87 = arith.maximumf %85, %86 : vector<128x64xf32>
    %c0_39 = arith.constant 0 : index
    %c0_40 = arith.constant 0 : index
    %88 = vector.load %arg6[%c0_39, %c0_40] : memref<2x64xf32, #tpu.memory_space<vmem>>, vector<2x64xf32>
    %cst_41 = arith.constant dense<0.000000e+00> : vector<2x128xf32>
    %89 = tpu.matmul %88, %87, %cst_41 {dimension_numbers = #tpu.dot_dimension_numbers<[1], [1], [0], [0], [0, 0, 1, 0], [], []>} : vector<2x64xf32>, vector<128x64xf32>, vector<2x128xf32> -> vector<2x128xf32>
    %90 = vector.broadcast %6 : vector<2x1xf32> to vector<2x128xf32>
    %91 = arith.addf %89, %90 : vector<2x128xf32>
    %c0_42 = arith.constant 0 : index
    %c0_43 = arith.constant 0 : index
    %92 = vector.load %arg8[%c0_42, %c0_43] : memref<2x128xf32, #tpu.memory_space<vmem>>, vector<2x128xf32>
    tpu.vector_store %arg8[%c0_42, %c0_43], %91 {strides = array<i32>} : memref<2x128xf32, #tpu.memory_space<vmem>>, vector<2x128xf32>,
    return
  }
  func.func @transform_0(%arg0: i32) -> (i32, i32) {
    %c0_i32 = arith.constant 0 : i32
    %c0_i32_0 = arith.constant 0 : i32
    return %arg0, %c0_i32 : i32, i32
  }
  func.func @transform_1(%arg0: i32) -> (i32, i32) {
    %c0_i32 = arith.constant 0 : i32
    %c0_i32_0 = arith.constant 0 : i32
    return %arg0, %c0_i32 : i32, i32
  }
  func.func @transform_2(%arg0: i32) -> (i32, i32) {
    %c0_i32 = arith.constant 0 : i32
    %c0_i32_0 = arith.constant 0 : i32
    %c0_i32_1 = arith.constant 0 : i32
    return %c0_i32, %c0_i32_0 : i32, i32
  }
  func.func @transform_3(%arg0: i32) -> (i32, i32) {
    %c0_i32 = arith.constant 0 : i32
    %c0_i32_0 = arith.constant 0 : i32
    %c0_i32_1 = arith.constant 0 : i32
    return %c0_i32, %c0_i32_0 : i32, i32
  }
  func.func @transform_4(%arg0: i32) -> (i32, i32) {
    %c0_i32 = arith.constant 0 : i32
    %c0_i32_0 = arith.constant 0 : i32
    %c0_i32_1 = arith.constant 0 : i32
    return %c0_i32, %c0_i32_0 : i32, i32
  }
  func.func @transform_5(%arg0: i32) -> (i32, i32) {
    %c0_i32 = arith.constant 0 : i32
    %c0_i32_0 = arith.constant 0 : i32
    %c0_i32_1 = arith.constant 0 : i32
    return %c0_i32, %c0_i32_0 : i32, i32
  }
  func.func @transform_6(%arg0: i32) -> (i32, i32) {
    %c0_i32 = arith.constant 0 : i32
    %c0_i32_0 = arith.constant 0 : i32
    %c0_i32_1 = arith.constant 0 : i32
    return %c0_i32, %c0_i32_0 : i32, i32
  }
  func.func @transform_7(%arg0: i32) -> (i32, i32) {
    %c0_i32 = arith.constant 0 : i32
    %c0_i32_0 = arith.constant 0 : i32
    return %c0_i32, %arg0 : i32, i32
  }
}

</mosaic_0001>

<llo_original>
// kernel: tpu_custom_call.1
$region0: #{tpu_custom_call.1}
  #allocation0 [shape = 'u32[]', space=smem, size = 0x4, offset = 0x4, fixed_abs, tag = 'smem constant byte address 0x4 - core index']
  #allocation1 [shape = 'u32[144,128]{1,0:T(1,128)}', space=vmem, size = 0x12000, scoped, tag = 'internal scratch']
  %s0 = inlined_call_operand.vmem [shape: f32[256,12], index: 0, kind: input, shape index: {}]
  %s1 = inlined_call_operand.vmem [shape: f32[256,4], index: 1, kind: input, shape index: {}]
  %s2 = inlined_call_operand.vmem [shape: f32[12,128], index: 2, kind: input, shape index: {}]
  %s3 = inlined_call_operand.vmem [shape: f32[4,128], index: 3, kind: input, shape index: {}]
  %s4 = inlined_call_operand.vmem [shape: f32[128,64], index: 4, kind: input, shape index: {}]
  %s5 = inlined_call_operand.vmem [shape: f32[2,64], index: 5, kind: input, shape index: {}]
  %s6 = inlined_call_operand.vmem [shape: f32[8,128], index: 6, kind: input, shape index: {}]
  %s7 = inlined_call_operand.hbm [shape: f32[2,256], index: 7, kind: output, shape index: {}]
  %s8 = sld [smem:[#allocation0]]
  $region61: #{tpu_custom_call.1} parent=0
    _
  %s10 = ssub.s32 1, %s8
  %s11 = scalar_select 0, %s10, %s8
  $region1: #{tpu_custom_call.1} parent=0
    #allocation2 [shape = 'u8[2048]{0}', space=vmem, size = 0x800, scoped, tag = 'output window, operand 0']
    #allocation3 [shape = 's32[2]{0}', space=sflag, size = 0x8, scoped, tag = 'scoped memory for tpu_custom_call.1']
    %12 = vsyncpa [#allocation3], 0
    %s13 = scalar_lea.sflag [#allocation3], 1
    %14 = vsyncpa %s13, 0
    loop: start=0, step=1, limit=4
    $region2: #{tpu_custom_call.1} parent=1 // loop_pre_header
      _
    $region3: #{tpu_custom_call.1} parent=1 // loop_header
      %s16 = sphi 0, %s20
      %p17 = scmp.ge.s32.totalorder %s16, 4
      %s26 = sphi 0, %s28
      %s29 = sphi 0, %s26
      %s30 = sphi 0, %s29
      %s46 = sphi 0, %s30
      %s52 = sphi 0, %s54
      %s55 = sphi 0, %s52
      %s56 = sphi 0, %s55
      %s72 = sphi 0, %s56
      %s76 = sphi 0, %s76
      %s78 = sphi 0, %s76
      %s79 = sphi 0, %s78
      %s93 = sphi 0, %s79
      %s97 = sphi 0, %s97
      %s99 = sphi 0, %s97
      %s100 = sphi 0, %s99
      %s114 = sphi 0, %s100
      %s118 = sphi 0, %s118
      %s120 = sphi 0, %s118
      %s121 = sphi 0, %s120
      %s135 = sphi 0, %s121
      %s139 = sphi 0, %s139
      %s141 = sphi 0, %s139
      %s142 = sphi 0, %s141
      %s156 = sphi 0, %s142
      %s160 = sphi 0, %s160
      %s162 = sphi 0, %s160
      %s163 = sphi 0, %s162
      %s177 = sphi 0, %s163
      %s183 = sphi 0, %s185
      %s186 = sphi 0, %s183
      %s187 = sphi 0, %s186
      %s203 = sphi 0, %s187
    $region4: #{tpu_custom_call.1} parent=1 // loop_header_branch
      %19 = sbr.rel (%p17) target = $region8
    $region5: #{tpu_custom_call.1} parent=1 // loop_body
      %s21 = ssub.s32 %s16, 1
      %s22 = ssub.s32 %s16, 2
      %s23 = sadd.s32 %s16, 1
      %s24 = ssub.s32 %s16, %s23
      %p25 = scmp.eq.s32.totalorder %s24, 0
      %s27 = sadd.s32 %s26, 1
      %s28 = scalar_select %p25, %s26, %s27
      %p31 = pneg %p25
      %p32 = scmp.eq.s32.totalorder %s16, 1
      %p33 = por %p31, %p32
      %p34 = scmp.ne.s32.totalorder %s26, %s29
      %p35 = scmp.eq.s32.totalorder %s16, 0
      %p36 = por %p34, %p35
      %p37 = scmp.ne.s32.totalorder %s26, %s29
      %p38 = scmp.eq.s32.totalorder %s21, 1
      %p39 = por %p37, %p38
      %p40 = scmp.ne.s32.totalorder %s29, %s30
      %p41 = scmp.eq.s32.totalorder %s21, 0
      %p42 = por %p40, %p41
      %p43 = scmp.ne.s32.totalorder %s29, %s30
      %p44 = scmp.eq.s32.totalorder %s22, 1
      %p45 = por %p43, %p44
      %p47 = scmp.ne.s32.totalorder %s30, %s46
      %p48 = scmp.eq.s32.totalorder %s22, 0
      %p49 = por %p47, %p48
      %s50 = ssub.s32 %s16, %s23
      %p51 = scmp.eq.s32.totalorder %s50, 0
      %s53 = sadd.s32 %s52, 1
      %s54 = scalar_select %p51, %s52, %s53
      %p57 = pneg %p51
      %p58 = scmp.eq.s32.totalorder %s16, 1
      %p59 = por %p57, %p58
      %p60 = scmp.ne.s32.totalorder %s52, %s55
      %p61 = scmp.eq.s32.totalorder %s16, 0
      %p62 = por %p60, %p61
      %p63 = scmp.ne.s32.totalorder %s52, %s55
      %p64 = scmp.eq.s32.totalorder %s21, 1
      %p65 = por %p63, %p64
      %p66 = scmp.ne.s32.totalorder %s55, %s56
      %p67 = scmp.eq.s32.totalorder %s21, 0
      %p68 = por %p66, %p67
      %p69 = scmp.ne.s32.totalorder %s55, %s56
      %p70 = scmp.eq.s32.totalorder %s22, 1
      %p71 = por %p69, %p70
      %p73 = scmp.ne.s32.totalorder %s56, %s72
      %p74 = scmp.eq.s32.totalorder %s22, 0
      %p75 = por %p73, %p74
      %s77 = sadd.s32 %s76, 1
      %p80 = scmp.eq.s32.totalorder %s16, 1
      %p81 = scmp.ne.s32.totalorder %s76, %s78
      %p82 = scmp.eq.s32.totalorder %s16, 0
      %p83 = por %p81, %p82
      %p84 = scmp.ne.s32.totalorder %s76, %s78
      %p85 = scmp.eq.s32.totalorder %s21, 1
      %p86 = por %p84, %p85
      %p87 = scmp.ne.s32.totalorder %s78, %s79
      %p88 = scmp.eq.s32.totalorder %s21, 0
      %p89 = por %p87, %p88
      %p90 = scmp.ne.s32.totalorder %s78, %s79
      %p91 = scmp.eq.s32.totalorder %s22, 1
      %p92 = por %p90, %p91
      %p94 = scmp.ne.s32.totalorder %s79, %s93
      %p95 = scmp.eq.s32.totalorder %s22, 0
      %p96 = por %p94, %p95
      %s98 = sadd.s32 %s97, 1
      %p101 = scmp.eq.s32.totalorder %s16, 1
      %p102 = scmp.ne.s32.totalorder %s97, %s99
      %p103 = scmp.eq.s32.totalorder %s16, 0
      %p104 = por %p102, %p103
      %p105 = scmp.ne.s32.totalorder %s97, %s99
      %p106 = scmp.eq.s32.totalorder %s21, 1
      %p107 = por %p105, %p106
      %p108 = scmp.ne.s32.totalorder %s99, %s100
      %p109 = scmp.eq.s32.totalorder %s21, 0
      %p110 = por %p108, %p109
      %p111 = scmp.ne.s32.totalorder %s99, %s100
      %p112 = scmp.eq.s32.totalorder %s22, 1
      %p113 = por %p111, %p112
      %p115 = scmp.ne.s32.totalorder %s100, %s114
      %p116 = scmp.eq.s32.totalorder %s22, 0
      %p117 = por %p115, %p116
      %s119 = sadd.s32 %s118, 1
      %p122 = scmp.eq.s32.totalorder %s16, 1
      %p123 = scmp.ne.s32.totalorder %s118, %s120
      %p124 = scmp.eq.s32.totalorder %s16, 0
      %p125 = por %p123, %p124
      %p126 = scmp.ne.s32.totalorder %s118, %s120
      %p127 = scmp.eq.s32.totalorder %s21, 1
      %p128 = por %p126, %p127
      %p129 = scmp.ne.s32.totalorder %s120, %s121
      %p130 = scmp.eq.s32.totalorder %s21, 0
      %p131 = por %p129, %p130
      %p132 = scmp.ne.s32.totalorder %s120, %s121
      %p133 = scmp.eq.s32.totalorder %s22, 1
      %p134 = por %p132, %p133
      %p136 = scmp.ne.s32.totalorder %s121, %s135
      %p137 = scmp.eq.s32.totalorder %s22, 0
      %p138 = por %p136, %p137
      %s140 = sadd.s32 %s139, 1
      %p143 = scmp.eq.s32.totalorder %s16, 1
      %p144 = scmp.ne.s32.totalorder %s139, %s141
      %p145 = scmp.eq.s32.totalorder %s16, 0
      %p146 = por %p144, %p145
      %p147 = scmp.ne.s32.totalorder %s139, %s141
      %p148 = scmp.eq.s32.totalorder %s21, 1
      %p149 = por %p147, %p148
      %p150 = scmp.ne.s32.totalorder %s141, %s142
      %p151 = scmp.eq.s32.totalorder %s21, 0
      %p152 = por %p150, %p151
      %p153 = scmp.ne.s32.totalorder %s141, %s142
      %p154 = scmp.eq.s32.totalorder %s22, 1
      %p155 = por %p153, %p154
      %p157 = scmp.ne.s32.totalorder %s142, %s156
      %p158 = scmp.eq.s32.totalorder %s22, 0
      %p159 = por %p157, %p158
      %s161 = sadd.s32 %s160, 1
      %p164 = scmp.eq.s32.totalorder %s16, 1
      %p165 = scmp.ne.s32.totalorder %s160, %s162
      %p166 = scmp.eq.s32.totalorder %s16, 0
      %p167 = por %p165, %p166
      %p168 = scmp.ne.s32.totalorder %s160, %s162
      %p169 = scmp.eq.s32.totalorder %s21, 1
      %p170 = por %p168, %p169
      %p171 = scmp.ne.s32.totalorder %s162, %s163
      %p172 = scmp.eq.s32.totalorder %s21, 0
      %p173 = por %p171, %p172
      %p174 = scmp.ne.s32.totalorder %s162, %s163
      %p175 = scmp.eq.s32.totalorder %s22, 1
      %p176 = por %p174, %p175
      %p178 = scmp.ne.s32.totalorder %s163, %s177
      %p179 = scmp.eq.s32.totalorder %s22, 0
      %p180 = por %p178, %p179
      %s181 = ssub.s32 %s16, %s23
      %p182 = scmp.eq.s32.totalorder %s181, 0
      %s184 = sadd.s32 %s183, 1
      %s185 = scalar_select %p182, %s183, %s184
      %p188 = pneg %p182
      %p189 = scmp.eq.s32.totalorder %s16, 1
      %p190 = por %p188, %p189
      %p191 = scmp.ne.s32.totalorder %s183, %s186
      %p192 = scmp.eq.s32.totalorder %s16, 0
      %p193 = por %p191, %p192
      %p194 = scmp.ne.s32.totalorder %s183, %s186
      %p195 = scmp.eq.s32.totalorder %s21, 1
      %p196 = por %p194, %p195
      %p197 = scmp.ne.s32.totalorder %s186, %s187
      %p198 = scmp.eq.s32.totalorder %s21, 0
      %p199 = por %p197, %p198
      %p200 = scmp.ne.s32.totalorder %s186, %s187
      %p201 = scmp.eq.s32.totalorder %s22, 1
      %p202 = por %p200, %p201
      %p204 = scmp.ne.s32.totalorder %s187, %s203
      %p205 = scmp.eq.s32.totalorder %s22, 0
      %p206 = por %p204, %p205
      %p207 = scmp.le.s32.totalorder 1, %s16
      %p208 = scmp.lt.s32.totalorder %s16, 3
      %p209 = pnand %p207, %p208
      %p210 = pneg %p209
      // Predicated region
      $region9: #{tpu_custom_call.1} parent=5 // pred_check
        _
      $region10: #{tpu_custom_call.1} parent=5 // pred_check_branch
        %212 = sbr.rel (%p209) target = $region12
      $region11: #{tpu_custom_call.1} parent=5 // pred_region
        %s213 = ssub.s32 %s16, 1
        // Predicated region
        $region13: #{tpu_custom_call.1} parent=11 // pred_check
          %p214 = pneg %p89
        $region14: #{tpu_custom_call.1} parent=11 // pred_check_branch
          %216 = sbr.rel (%p214) target = $region16
        $region15: #{tpu_custom_call.1} parent=11 // pred_region
          _
        $region16: #{tpu_custom_call.1} parent=11 // pred_fallthru
          _
        // Predicated region
        $region17: #{tpu_custom_call.1} parent=11 // pred_check
          %p217 = pneg %p110
        $region18: #{tpu_custom_call.1} parent=11 // pred_check_branch
          %219 = sbr.rel (%p217) target = $region20
        $region19: #{tpu_custom_call.1} parent=11 // pred_region
          _
        $region20: #{tpu_custom_call.1} parent=11 // pred_fallthru
          _
        // Predicated region
        $region21: #{tpu_custom_call.1} parent=11 // pred_check
          %p220 = pneg %p131
        $region22: #{tpu_custom_call.1} parent=11 // pred_check_branch
          %222 = sbr.rel (%p220) target = $region24
        $region23: #{tpu_custom_call.1} parent=11 // pred_region
          _
        $region24: #{tpu_custom_call.1} parent=11 // pred_fallthru
          _
        // Predicated region
        $region25: #{tpu_custom_call.1} parent=11 // pred_check
          %p223 = pneg %p152
        $region26: #{tpu_custom_call.1} parent=11 // pred_check_branch
          %225 = sbr.rel (%p223) target = $region28
        $region27: #{tpu_custom_call.1} parent=11 // pred_region
          _
        $region28: #{tpu_custom_call.1} parent=11 // pred_fallthru
          _
        // Predicated region
        $region29: #{tpu_custom_call.1} parent=11 // pred_check
          %p226 = pneg %p173
        $region30: #{tpu_custom_call.1} parent=11 // pred_check_branch
          %228 = sbr.rel (%p226) target = $region32
        $region31: #{tpu_custom_call.1} parent=11 // pred_region
          _
        $region32: #{tpu_custom_call.1} parent=11 // pred_fallthru
          _
      $region12: #{tpu_custom_call.1} parent=5 // pred_fallthru
        _
      %p229 = scmp.lt.s32.totalorder %s16, 2
      // Predicated region
      $region33: #{tpu_custom_call.1} parent=5 // pred_check
        %p230 = pneg %p229
      $region34: #{tpu_custom_call.1} parent=5 // pred_check_branch
        %232 = sbr.rel (%p230) target = $region36
      $region35: #{tpu_custom_call.1} parent=5 // pred_region
        // Predicated region
        $region37: #{tpu_custom_call.1} parent=35 // pred_check
          %p233 = pneg %p36
        $region38: #{tpu_custom_call.1} parent=35 // pred_check_branch
          %235 = sbr.rel (%p233) target = $region40
        $region39: #{tpu_custom_call.1} parent=35 // pred_region
          %s236 = smul.u32 16, %s16
          %p237 = scmp.lt.s32.totalorder %s236, 31
          %s238 = scalar_select %p237, %s236, 31
          %s239 = smul.addr %s238, 8
          %s240 = scalar_lea.vmem %s0, %s239
          %s241 = smul.u32 16, %s16
        $region40: #{tpu_custom_call.1} parent=35 // pred_fallthru
          _
        // Predicated region
        $region41: #{tpu_custom_call.1} parent=35 // pred_check
          %p242 = pneg %p62
        $region42: #{tpu_custom_call.1} parent=35 // pred_check_branch
          %244 = sbr.rel (%p242) target = $region44
        $region43: #{tpu_custom_call.1} parent=35 // pred_region
          %s245 = smul.u32 16, %s16
          %p246 = scmp.lt.s32.totalorder %s245, 31
          %s247 = scalar_select %p246, %s245, 31
          %s248 = smul.addr %s247, 8
          %s249 = scalar_lea.vmem %s1, %s248
          %s250 = smul.u32 16, %s16
        $region44: #{tpu_custom_call.1} parent=35 // pred_fallthru
          _
      $region36: #{tpu_custom_call.1} parent=5 // pred_fallthru
        _
      %p251 = scmp.le.s32.totalorder 1, %s16
      %p252 = scmp.lt.s32.totalorder %s16, 3
      %p253 = pnand %p251, %p252
      %p254 = pneg %p253
      // Predicated region
      $region45: #{tpu_custom_call.1} parent=5 // pred_check
        _
      $region46: #{tpu_custom_call.1} parent=5 // pred_check_branch
        %256 = sbr.rel (%p253) target = $region48
      $region47: #{tpu_custom_call.1} parent=5 // pred_region
        %s257 = ssub.s32 %s16, 1
        %s258 = smul.u32 16, %s21
        %p259 = scmp.lt.s32.totalorder %s258, 31
        %s260 = scalar_select %p259, %s258, 31
        %s261 = smul.addr %s260, 8
        %s262 = scalar_lea.vmem %s0, %s261
        %p263 = pneg %p42
        %p264 = pneg %p39
        %s265 = smul.u32 16, %s21
        %p266 = scmp.lt.s32.totalorder %s265, 31
        %s267 = scalar_select %p266, %s265, 31
        %s268 = smul.addr %s267, 8
        %s269 = scalar_lea.vmem %s1, %s268
        %p270 = pneg %p68
        %p271 = pneg %p65
        %p272 = pneg %p89
        %p273 = pneg %p86
        %p274 = pneg %p110
        %p275 = pneg %p107
        %p276 = pneg %p131
        %p277 = pneg %p128
        %p278 = pneg %p152
        %p279 = pneg %p149
        %p280 = pneg %p173
        %p281 = pneg %p170
        %p282 = pneg %p199
        %p283 = pneg %p196
        %s284 = sand.u32 %s186, 1
        %s285 = scalar_lea.sflag [#allocation3], %s284
        %s286 = sand.u32 %s186, 1
        %s287 = smul.addr %s286, 2
        %s288 = scalar_lea.vmem [#allocation2], %s287
        %s289 = smul.u32 16, %s21
        %p290 = scmp.lt.s32.totalorder %s289, 31
        %s291 = scalar_select %p290, %s289, 31
        %s292 = smul.addr %s291, 8
        %s293 = scalar_lea.vmem %s0, %s292
        %s294 = smul.u32 16, %s21
        %s295 = smul.u32 16, %s21
        %p296 = scmp.lt.s32.totalorder %s295, 31
        %s297 = scalar_select %p296, %s295, 31
        %s298 = smul.addr %s297, 8
        %s299 = scalar_lea.vmem %s1, %s298
        %s300 = smul.u32 16, %s21
        %v301 = vld [vmem:[%s6] sm:$0x1]
        %v302 = vld [vmem:[%s6 + $0x1] sm:$0x1]
        %v303 = vld [vmem:[%s6 + $0x2] sm:$0x1]
        %v304 = vld [vmem:[%s6 + $0x3] sm:$0x1]
        %v305 = vld [vmem:[%s6 + $0x4] sm:$0x1]
        %v306 = vld [vmem:[%s6 + $0x5] sm:$0x1]
        %v307 = vld [vmem:[%s6 + $0x6] sm:$0x3]
        %v308 = vld [vmem:[%s293] sm:$0xff]
        %v309 = vld [vmem:[%s293 + $0x8] sm:$0xff]
        %v310 = vld [vmem:[%s293 + $0x10] sm:$0xff]
        %v311 = vld [vmem:[%s293 + $0x18] sm:$0xff]
        %v312 = vld [vmem:[%s293 + $0x20] sm:$0xff]
        %v313 = vld [vmem:[%s293 + $0x28] sm:$0xff]
        %v314 = vld [vmem:[%s293 + $0x30] sm:$0xff]
        %v315 = vld [vmem:[%s293 + $0x38] sm:$0xff]
        %v316 = vld [vmem:[%s293 + $0x40] sm:$0xff]
        %v317 = vld [vmem:[%s293 + $0x48] sm:$0xff]
        %v318 = vld [vmem:[%s293 + $0x50] sm:$0xff]
        %v319 = vld [vmem:[%s293 + $0x58] sm:$0xff]
        %v320 = vld [vmem:[%s293 + $0x60] sm:$0xff]
        %v321 = vld [vmem:[%s293 + $0x68] sm:$0xff]
        %v322 = vld [vmem:[%s293 + $0x70] sm:$0xff]
        %v323 = vld [vmem:[%s293 + $0x78] sm:$0xff]
        %v324 = vld [vmem:[%s2] sm:$0xff]
        %v325 = vld [vmem:[%s2 + $0x8] sm:$0xf]
        %v326 = vld [vmem:[%s299] sm:$0xff]
        %v327 = vld [vmem:[%s299 + $0x8] sm:$0xff]
        %v328 = vld [vmem:[%s299 + $0x10] sm:$0xff]
        %v329 = vld [vmem:[%s299 + $0x18] sm:$0xff]
        %v330 = vld [vmem:[%s299 + $0x20] sm:$0xff]
        %v331 = vld [vmem:[%s299 + $0x28] sm:$0xff]
        %v332 = vld [vmem:[%s299 + $0x30] sm:$0xff]
        %v333 = vld [vmem:[%s299 + $0x38] sm:$0xff]
        %v334 = vld [vmem:[%s299 + $0x40] sm:$0xff]
        %v335 = vld [vmem:[%s299 + $0x48] sm:$0xff]
        %v336 = vld [vmem:[%s299 + $0x50] sm:$0xff]
        %v337 = vld [vmem:[%s299 + $0x58] sm:$0xff]
        %v338 = vld [vmem:[%s299 + $0x60] sm:$0xff]
        %v339 = vld [vmem:[%s299 + $0x68] sm:$0xff]
        %v340 = vld [vmem:[%s299 + $0x70] sm:$0xff]
        %v341 = vld [vmem:[%s299 + $0x78] sm:$0xff]
        %v342 = vld [vmem:[%s3] sm:$0xf]
        %vm343 = vcmask 31744
        %v345 = vsel %vm343, %v326, 0
        %v348 = vsel %vm343, %v327, 0
        %v351 = vsel %vm343, %v328, 0
        %v354 = vsel %vm343, %v329, 0
        %v357 = vsel %vm343, %v330, 0
        %v360 = vsel %vm343, %v331, 0
        %v363 = vsel %vm343, %v332, 0
        %v366 = vsel %vm343, %v333, 0
        %v369 = vsel %vm343, %v334, 0
        %v372 = vsel %vm343, %v335, 0
        %v375 = vsel %vm343, %v336, 0
        %v378 = vsel %vm343, %v337, 0
        %v381 = vsel %vm343, %v338, 0
        %v384 = vsel %vm343, %v339, 0
        %v387 = vsel %vm343, %v340, 0
        %v390 = vsel %vm343, %v341, 0
        %vm392 = vcmask 1043456
        %v394 = vsel %vm392, %v342, 0
        %396 = vmatprep.subr.mxu0 0.0
        %397 = vmatpush1.msra.mxu0 0.0
        %398 = vmatprep.subr.mxu0 0.0
        %399 = vmatpush1.msra.mxu0 0.0
        %400 = vmatprep.subr.mxu0 0.0
        %401 = vmatpush1.msra.mxu0 0.0
        %402 = vmatprep.subr.mxu0 0.0
        %403 = vmatpush1.msra.mxu0 0.0
        %404 = vmatprep.subr.mxu0 0.0
        %405 = vmatpush1.msra.mxu0 0.0
        %406 = vmatprep.subr.mxu0 0.0
        %407 = vmatpush1.msra.mxu0 0.0
        %408 = vmatprep.subr.mxu0 0.0
        %409 = vmatpush1.msra.mxu0 0.0
        %410 = vmatprep.subr.mxu0 0.0
        %411 = vmatpush1.msra.mxu0 0.0
        %412 = vmatprep.subr.mxu0 0.0
        %413 = vmatpush1.msra.mxu0 0.0
        %414 = vmatprep.subr.mxu0 0.0
        %415 = vmatpush1.msra.mxu0 0.0
        %416 = vmatprep.subr.mxu0 0.0
        %417 = vmatpush1.msra.mxu0 0.0
        %418 = vmatprep.subr.mxu0 0.0
        %419 = vmatpush1.msra.mxu0 0.0
        %420 = vmatprep.subr.mxu0 0.0
        %421 = vmatpush1.msra.mxu0 0.0
        %422 = vmatprep.subr.mxu0 0.0
        %423 = vmatpush1.msra.mxu0 0.0
        %424 = vmatprep.subr.mxu0 0.0
        %425 = vmatpush1.msra.mxu0 0.0
        %426 = vmatprep.subr.mxu0 0.0
        %427 = vmatpush1.msra.mxu0 %v394
        %428 = vmatprep.subr.mxu0 0.0
        %429 = vmatpush2.msra.mxu0 0.0
        %430 = vmatprep.subr.mxu0 0.0
        %431 = vmatpush2.msra.mxu0 0.0
        %432 = vmatprep.subr.mxu0 0.0
        %433 = vmatpush2.msra.mxu0 0.0
        %434 = vmatprep.subr.mxu0 0.0
        %435 = vmatpush2.msra.mxu0 0.0
        %436 = vmatprep.subr.mxu0 0.0
        %437 = vmatpush2.msra.mxu0 0.0
        %438 = vmatprep.subr.mxu0 0.0
        %439 = vmatpush2.msra.mxu0 0.0
        %440 = vmatprep.subr.mxu0 0.0
        %441 = vmatpush2.msra.mxu0 0.0
        %442 = vmatprep.subr.mxu0 0.0
        %443 = vmatpush2.msra.mxu0 0.0
        %444 = vmatprep.subr.mxu0 0.0
        %445 = vmatpush2.msra.mxu0 0.0
        %446 = vmatprep.subr.mxu0 0.0
        %447 = vmatpush2.msra.mxu0 0.0
        %448 = vmatprep.subr.mxu0 0.0
        %449 = vmatpush2.msra.mxu0 0.0
        %450 = vmatprep.subr.mxu0 0.0
        %451 = vmatpush2.msra.mxu0 0.0
        %452 = vmatprep.subr.mxu0 0.0
        %453 = vmatpush2.msra.mxu0 0.0
        %454 = vmatprep.subr.mxu0 0.0
        %455 = vmatpush2.msra.mxu0 0.0
        %456 = vmatprep.subr.mxu0 0.0
        %457 = vmatpush2.msra.mxu0 0.0
        %458 = vmatprep.subr.mxu0 0.0
        %459 = vmatpush2.msra.mxu0 0.0
        %460 = vmatprep.mubr.f32.mxu0 0.0
        %461 = vmatmul.mubr.f32.gmra.mxu0 %v345
        %v462 = vpop.f32.mrf.mxu0
        %v463 = vadd.f32 0.0, %v462
        %v464 = vpop.f32.mrf.mxu0
        %465 = vmatprep.mubr.f32.mxu0 0.0
        %466 = vmatmul.mubr.f32.gmra.mxu0 %v348
        %v467 = vpop.f32.mrf.mxu0
        %v468 = vadd.f32 0.0, %v467
        %v469 = vpop.f32.mrf.mxu0
        %470 = vmatprep.mubr.f32.mxu0 0.0
        %471 = vmatmul.mubr.f32.gmra.mxu0 %v351
        %v472 = vpop.f32.mrf.mxu0
        %v473 = vadd.f32 0.0, %v472
        %v474 = vpop.f32.mrf.mxu0
        %475 = vmatprep.mubr.f32.mxu0 0.0
        %476 = vmatmul.mubr.f32.gmra.mxu0 %v354
        %v477 = vpop.f32.mrf.mxu0
        %v478 = vadd.f32 0.0, %v477
        %v479 = vpop.f32.mrf.mxu0
        %480 = vmatprep.mubr.f32.mxu0 0.0
        %481 = vmatmul.mubr.f32.gmra.mxu0 %v357
        %v482 = vpop.f32.mrf.mxu0
        %v483 = vadd.f32 0.0, %v482
        %v484 = vpop.f32.mrf.mxu0
        %485 = vmatprep.mubr.f32.mxu0 0.0
        %486 = vmatmul.mubr.f32.gmra.mxu0 %v360
        %v487 = vpop.f32.mrf.mxu0
        %v488 = vadd.f32 0.0, %v487
        %v489 = vpop.f32.mrf.mxu0
        %490 = vmatprep.mubr.f32.mxu0 0.0
        %491 = vmatmul.mubr.f32.gmra.mxu0 %v363
        %v492 = vpop.f32.mrf.mxu0
        %v493 = vadd.f32 0.0, %v492
        %v494 = vpop.f32.mrf.mxu0
        %495 = vmatprep.mubr.f32.mxu0 0.0
        %496 = vmatmul.mubr.f32.gmra.mxu0 %v366
        %v497 = vpop.f32.mrf.mxu0
        %v498 = vadd.f32 0.0, %v497
        %v499 = vpop.f32.mrf.mxu0
        %500 = vmatprep.mubr.f32.mxu0 0.0
        %501 = vmatmul.mubr.f32.gmra.mxu0 %v369
        %v502 = vpop.f32.mrf.mxu0
        %v503 = vadd.f32 0.0, %v502
        %v504 = vpop.f32.mrf.mxu0
        %505 = vmatprep.mubr.f32.mxu0 0.0
        %506 = vmatmul.mubr.f32.gmra.mxu0 %v372
        %v507 = vpop.f32.mrf.mxu0
        %v508 = vadd.f32 0.0, %v507
        %v509 = vpop.f32.mrf.mxu0
        %510 = vmatprep.mubr.f32.mxu0 0.0
        %511 = vmatmul.mubr.f32.gmra.mxu0 %v375
        %v512 = vpop.f32.mrf.mxu0
        %v513 = vadd.f32 0.0, %v512
        %v514 = vpop.f32.mrf.mxu0
        %515 = vmatprep.mubr.f32.mxu0 0.0
        %516 = vmatmul.mubr.f32.gmra.mxu0 %v378
        %v517 = vpop.f32.mrf.mxu0
        %v518 = vadd.f32 0.0, %v517
        %v519 = vpop.f32.mrf.mxu0
        %520 = vmatprep.mubr.f32.mxu0 0.0
        %521 = vmatmul.mubr.f32.gmra.mxu0 %v381
        %v522 = vpop.f32.mrf.mxu0
        %v523 = vadd.f32 0.0, %v522
        %v524 = vpop.f32.mrf.mxu0
        %525 = vmatprep.mubr.f32.mxu0 0.0
        %526 = vmatmul.mubr.f32.gmra.mxu0 %v384
        %v527 = vpop.f32.mrf.mxu0
        %v528 = vadd.f32 0.0, %v527
        %v529 = vpop.f32.mrf.mxu0
        %530 = vmatprep.mubr.f32.mxu0 0.0
        %531 = vmatmul.mubr.f32.gmra.mxu0 %v387
        %v532 = vpop.f32.mrf.mxu0
        %v533 = vadd.f32 0.0, %v532
        %v534 = vpop.f32.mrf.mxu0
        %535 = vmatprep.mubr.f32.mxu0 0.0
        %536 = vmatmul.mubr.f32.gmra.mxu0 %v390
        %v537 = vpop.f32.mrf.mxu0
        %v538 = vadd.f32 0.0, %v537
        %v539 = vpop.f32.mrf.mxu0
        %540 = vdwg.mxu0
        %vm541 = vcmask 97280
        %v543 = vsel %vm541, %v308, 0
        %v546 = vsel %vm541, %v309, 0
        %v549 = vsel %vm541, %v310, 0
        %v552 = vsel %vm541, %v311, 0
        %v555 = vsel %vm541, %v312, 0
        %v558 = vsel %vm541, %v313, 0
        %v561 = vsel %vm541, %v314, 0
        %v564 = vsel %vm541, %v315, 0
        %v567 = vsel %vm541, %v316, 0
        %v570 = vsel %vm541, %v317, 0
        %v573 = vsel %vm541, %v318, 0
        %v576 = vsel %vm541, %v319, 0
        %v579 = vsel %vm541, %v320, 0
        %v582 = vsel %vm541, %v321, 0
        %v585 = vsel %vm541, %v322, 0
        %v588 = vsel %vm541, %v323, 0
        %v591 = vsel %vm392, %v325, 0
        %593 = vmatprep.subr.mxu0 0.0
        %594 = vmatpush1.msra.mxu0 0.0
        %595 = vmatprep.subr.mxu0 0.0
        %596 = vmatpush1.msra.mxu0 0.0
        %597 = vmatprep.subr.mxu0 0.0
        %598 = vmatpush1.msra.mxu0 0.0
        %599 = vmatprep.subr.mxu0 0.0
        %600 = vmatpush1.msra.mxu0 0.0
        %601 = vmatprep.subr.mxu0 0.0
        %602 = vmatpush1.msra.mxu0 0.0
        %603 = vmatprep.subr.mxu0 0.0
        %604 = vmatpush1.msra.mxu0 0.0
        %605 = vmatprep.subr.mxu0 0.0
        %606 = vmatpush1.msra.mxu0 0.0
        %607 = vmatprep.subr.mxu0 0.0
        %608 = vmatpush1.msra.mxu0 0.0
        %609 = vmatprep.subr.mxu0 0.0
        %610 = vmatpush1.msra.mxu0 0.0
        %611 = vmatprep.subr.mxu0 0.0
        %612 = vmatpush1.msra.mxu0 0.0
        %613 = vmatprep.subr.mxu0 0.0
        %614 = vmatpush1.msra.mxu0 0.0
        %615 = vmatprep.subr.mxu0 0.0
        %616 = vmatpush1.msra.mxu0 0.0
        %617 = vmatprep.subr.mxu0 0.0
        %618 = vmatpush1.msra.mxu0 0.0
        %619 = vmatprep.subr.mxu0 0.0
        %620 = vmatpush1.msra.mxu0 0.0
        %621 = vmatprep.subr.mxu0 0.0
        %622 = vmatpush1.msra.mxu0 %v591
        %623 = vmatprep.subr.mxu0 0.0
        %624 = vmatpush1.msra.mxu0 %v324
        %625 = vmatprep.subr.mxu0 0.0
        %626 = vmatpush2.msra.mxu0 0.0
        %627 = vmatprep.subr.mxu0 0.0
        %628 = vmatpush2.msra.mxu0 0.0
        %629 = vmatprep.subr.mxu0 0.0
        %630 = vmatpush2.msra.mxu0 0.0
        %631 = vmatprep.subr.mxu0 0.0
        %632 = vmatpush2.msra.mxu0 0.0
        %633 = vmatprep.subr.mxu0 0.0
        %634 = vmatpush2.msra.mxu0 0.0
        %635 = vmatprep.subr.mxu0 0.0
        %636 = vmatpush2.msra.mxu0 0.0
        %637 = vmatprep.subr.mxu0 0.0
        %638 = vmatpush2.msra.mxu0 0.0
        %639 = vmatprep.subr.mxu0 0.0
        %640 = vmatpush2.msra.mxu0 0.0
        %641 = vmatprep.subr.mxu0 0.0
        %642 = vmatpush2.msra.mxu0 0.0
        %643 = vmatprep.subr.mxu0 0.0
        %644 = vmatpush2.msra.mxu0 0.0
        %645 = vmatprep.subr.mxu0 0.0
        %646 = vmatpush2.msra.mxu0 0.0
        %647 = vmatprep.subr.mxu0 0.0
        %648 = vmatpush2.msra.mxu0 0.0
        %649 = vmatprep.subr.mxu0 0.0
        %650 = vmatpush2.msra.mxu0 0.0
        %651 = vmatprep.subr.mxu0 0.0
        %652 = vmatpush2.msra.mxu0 0.0
        %653 = vmatprep.subr.mxu0 0.0
        %654 = vmatpush2.msra.mxu0 0.0
        %655 = vmatprep.subr.mxu0 0.0
        %656 = vmatpush2.msra.mxu0 0.0
        %657 = vmatprep.mubr.f32.mxu0 0.0
        %658 = vmatmul.mubr.f32.gmra.mxu0 %v543
        %v659 = vpop.f32.mrf.mxu0
        %v660 = vadd.f32 %v463, %v659
        %v661 = vpop.f32.mrf.mxu0
        %662 = vmatprep.mubr.f32.mxu0 0.0
        %663 = vmatmul.mubr.f32.gmra.mxu0 %v546
        %v664 = vpop.f32.mrf.mxu0
        %v665 = vadd.f32 %v468, %v664
        %v666 = vpop.f32.mrf.mxu0
        %667 = vmatprep.mubr.f32.mxu0 0.0
        %668 = vmatmul.mubr.f32.gmra.mxu0 %v549
        %v669 = vpop.f32.mrf.mxu0
        %v670 = vadd.f32 %v473, %v669
        %v671 = vpop.f32.mrf.mxu0
        %672 = vmatprep.mubr.f32.mxu0 0.0
        %673 = vmatmul.mubr.f32.gmra.mxu0 %v552
        %v674 = vpop.f32.mrf.mxu0
        %v675 = vadd.f32 %v478, %v674
        %v676 = vpop.f32.mrf.mxu0
        %677 = vmatprep.mubr.f32.mxu0 0.0
        %678 = vmatmul.mubr.f32.gmra.mxu0 %v555
        %v679 = vpop.f32.mrf.mxu0
        %v680 = vadd.f32 %v483, %v679
        %v681 = vpop.f32.mrf.mxu0
        %682 = vmatprep.mubr.f32.mxu0 0.0
        %683 = vmatmul.mubr.f32.gmra.mxu0 %v558
        %v684 = vpop.f32.mrf.mxu0
        %v685 = vadd.f32 %v488, %v684
        %v686 = vpop.f32.mrf.mxu0
        %687 = vmatprep.mubr.f32.mxu0 0.0
        %688 = vmatmul.mubr.f32.gmra.mxu0 %v561
        %v689 = vpop.f32.mrf.mxu0
        %v690 = vadd.f32 %v493, %v689
        %v691 = vpop.f32.mrf.mxu0
        %692 = vmatprep.mubr.f32.mxu0 0.0
        %693 = vmatmul.mubr.f32.gmra.mxu0 %v564
        %v694 = vpop.f32.mrf.mxu0
        %v695 = vadd.f32 %v498, %v694
        %v696 = vpop.f32.mrf.mxu0
        %697 = vmatprep.mubr.f32.mxu0 0.0
        %698 = vmatmul.mubr.f32.gmra.mxu0 %v567
        %v699 = vpop.f32.mrf.mxu0
        %v700 = vadd.f32 %v503, %v699
        %v701 = vpop.f32.mrf.mxu0
        %702 = vmatprep.mubr.f32.mxu0 0.0
        %703 = vmatmul.mubr.f32.gmra.mxu0 %v570
        %v704 = vpop.f32.mrf.mxu0
        %v705 = vadd.f32 %v508, %v704
        %v706 = vpop.f32.mrf.mxu0
        %707 = vmatprep.mubr.f32.mxu0 0.0
        %708 = vmatmul.mubr.f32.gmra.mxu0 %v573
        %v709 = vpop.f32.mrf.mxu0
        %v710 = vadd.f32 %v513, %v709
        %v711 = vpop.f32.mrf.mxu0
        %712 = vmatprep.mubr.f32.mxu0 0.0
        %713 = vmatmul.mubr.f32.gmra.mxu0 %v576
        %v714 = vpop.f32.mrf.mxu0
        %v715 = vadd.f32 %v518, %v714
        %v716 = vpop.f32.mrf.mxu0
        %717 = vmatprep.mubr.f32.mxu0 0.0
        %718 = vmatmul.mubr.f32.gmra.mxu0 %v579
        %v719 = vpop.f32.mrf.mxu0
        %v720 = vadd.f32 %v523, %v719
        %v721 = vpop.f32.mrf.mxu0
        %722 = vmatprep.mubr.f32.mxu0 0.0
        %723 = vmatmul.mubr.f32.gmra.mxu0 %v582
        %v724 = vpop.f32.mrf.mxu0
        %v725 = vadd.f32 %v528, %v724
        %v726 = vpop.f32.mrf.mxu0
        %727 = vmatprep.mubr.f32.mxu0 0.0
        %728 = vmatmul.mubr.f32.gmra.mxu0 %v585
        %v729 = vpop.f32.mrf.mxu0
        %v730 = vadd.f32 %v533, %v729
        %v731 = vpop.f32.mrf.mxu0
        %732 = vmatprep.mubr.f32.mxu0 0.0
        %733 = vmatmul.mubr.f32.gmra.mxu0 %v588
        %v734 = vpop.f32.mrf.mxu0
        %v735 = vadd.f32 %v538, %v734
        %v736 = vpop.f32.mrf.mxu0
        %737 = vdwg.mxu0
        %v738 = vlaneseq
        %v739 = vshrl.u32 %v738, 7
        %v740 = vsub.s32 0, %v739
        %v741 = vrot.slane %v301, %v740
        %v742 = vadd.f32 %v660, %v741
        %v743 = vadd.f32 %v665, %v741
        %v744 = vadd.f32 %v670, %v741
        %v745 = vadd.f32 %v675, %v741
        %v746 = vadd.f32 %v680, %v741
        %v747 = vadd.f32 %v685, %v741
        %v748 = vadd.f32 %v690, %v741
        %v749 = vadd.f32 %v695, %v741
        %v750 = vadd.f32 %v700, %v741
        %v751 = vadd.f32 %v705, %v741
        %v752 = vadd.f32 %v710, %v741
        %v753 = vadd.f32 %v715, %v741
        %v754 = vadd.f32 %v720, %v741
        %v755 = vadd.f32 %v725, %v741
        %v756 = vadd.f32 %v730, %v741
        %v757 = vadd.f32 %v735, %v741
        %v758 = vmax.f32 %v742, 0.0
        %v759 = vmax.f32 %v743, 0.0
        %v760 = vmax.f32 %v744, 0.0
        %v761 = vmax.f32 %v745, 0.0
        %v762 = vmax.f32 %v746, 0.0
        %v763 = vmax.f32 %v747, 0.0
        %v764 = vmax.f32 %v748, 0.0
        %v765 = vmax.f32 %v749, 0.0
        %v766 = vmax.f32 %v750, 0.0
        %v767 = vmax.f32 %v751, 0.0
        %v768 = vmax.f32 %v752, 0.0
        %v769 = vmax.f32 %v753, 0.0
        %v770 = vmax.f32 %v754, 0.0
        %v771 = vmax.f32 %v755, 0.0
        %v772 = vmax.f32 %v756, 0.0
        %v773 = vmax.f32 %v757, 0.0
        %v774 = vlaneseq
        %v775 = vshrl.u32 %v774, 7
        %v776 = vlaneseq
        %v777 = vand.u32 %v776, 127
        %vm778 = vcmp.ge.s32.totalorder %v777, 64
        %v779 = vsel %vm778, 1, 0
        %vm780 = vcmp.eq.s32.totalorder %v779, %v775
        %v781 = vsel %vm780, 1, 0
        %v782 = vcvt.s32.f32 %v781
        %783 = vmatprep.subr.mxu0 0.0
        %784 = vmatpush1.xpose.msra.mxu0 0.0
        %785 = vmatprep.subr.mxu0 0.0
        %786 = vmatpush1.xpose.msra.mxu0 0.0
        %787 = vmatprep.subr.mxu0 0.0
        %788 = vmatpush1.xpose.msra.mxu0 0.0
        %789 = vmatprep.subr.mxu0 0.0
        %790 = vmatpush1.xpose.msra.mxu0 0.0
        %791 = vmatprep.subr.mxu0 0.0
        %792 = vmatpush1.xpose.msra.mxu0 0.0
        %793 = vmatprep.subr.mxu0 0.0
        %794 = vmatpush1.xpose.msra.mxu0 0.0
        %795 = vmatprep.subr.mxu0 0.0
        %796 = vmatpush1.xpose.msra.mxu0 0.0
        %797 = vmatprep.subr.mxu0 0.0
        %798 = vmatpush1.xpose.msra.mxu0 0.0
        %799 = vmatprep.subr.mxu0 0.0
        %800 = vmatpush1.xpose.msra.mxu0 0.0
        %801 = vmatprep.subr.mxu0 0.0
        %802 = vmatpush1.xpose.msra.mxu0 0.0
        %803 = vmatprep.subr.mxu0 0.0
        %804 = vmatpush1.xpose.msra.mxu0 0.0
        %805 = vmatprep.subr.mxu0 0.0
        %806 = vmatpush1.xpose.msra.mxu0 0.0
        %807 = vmatprep.subr.mxu0 0.0
        %808 = vmatpush1.xpose.msra.mxu0 0.0
        %809 = vmatprep.subr.mxu0 0.0
        %810 = vmatpush1.xpose.msra.mxu0 0.0
        %811 = vmatprep.subr.mxu0 0.0
        %812 = vmatpush1.xpose.msra.mxu0 0.0
        %813 = vmatprep.subr.mxu0 0.0
        %814 = vmatpush1.xpose.msra.mxu0 %v782
        %815 = vmatprep.subr.mxu0 0.0
        %816 = vmatpush2.xpose.msra.mxu0 0.0
        %817 = vmatprep.subr.mxu0 0.0
        %818 = vmatpush2.xpose.msra.mxu0 0.0
        %819 = vmatprep.subr.mxu0 0.0
        %820 = vmatpush2.xpose.msra.mxu0 0.0
        %821 = vmatprep.subr.mxu0 0.0
        %822 = vmatpush2.xpose.msra.mxu0 0.0
        %823 = vmatprep.subr.mxu0 0.0
        %824 = vmatpush2.xpose.msra.mxu0 0.0
        %825 = vmatprep.subr.mxu0 0.0
        %826 = vmatpush2.xpose.msra.mxu0 0.0
        %827 = vmatprep.subr.mxu0 0.0
        %828 = vmatpush2.xpose.msra.mxu0 0.0
        %829 = vmatprep.subr.mxu0 0.0
        %830 = vmatpush2.xpose.msra.mxu0 0.0
        %831 = vmatprep.subr.mxu0 0.0
        %832 = vmatpush2.xpose.msra.mxu0 0.0
        %833 = vmatprep.subr.mxu0 0.0
        %834 = vmatpush2.xpose.msra.mxu0 0.0
        %835 = vmatprep.subr.mxu0 0.0
        %836 = vmatpush2.xpose.msra.mxu0 0.0
        %837 = vmatprep.subr.mxu0 0.0
        %838 = vmatpush2.xpose.msra.mxu0 0.0
        %839 = vmatprep.subr.mxu0 0.0
        %840 = vmatpush2.xpose.msra.mxu0 0.0
        %841 = vmatprep.subr.mxu0 0.0
        %842 = vmatpush2.xpose.msra.mxu0 0.0
        %843 = vmatprep.subr.mxu0 0.0
        %844 = vmatpush2.xpose.msra.mxu0 0.0
        %845 = vmatprep.subr.mxu0 0.0
        %846 = vmatpush2.xpose.msra.mxu0 0.0
        %847 = vmatprep.mubr.f32.mxu0 0.0
        %848 = vmatmul.mubr.f32.gmra.mxu0 %v758
        %v849 = vpop.f32.mrf.mxu0
        %v850 = vadd.f32 0.0, %v849
        %v851 = vpop.f32.mrf.mxu0
        %852 = vmatprep.mubr.f32.mxu0 0.0
        %853 = vmatmul.mubr.f32.gmra.mxu0 %v759
        %v854 = vpop.f32.mrf.mxu0
        %v855 = vadd.f32 0.0, %v854
        %v856 = vpop.f32.mrf.mxu0
        %857 = vmatprep.mubr.f32.mxu0 0.0
        %858 = vmatmul.mubr.f32.gmra.mxu0 %v760
        %v859 = vpop.f32.mrf.mxu0
        %v860 = vadd.f32 0.0, %v859
        %v861 = vpop.f32.mrf.mxu0
        %862 = vmatprep.mubr.f32.mxu0 0.0
        %863 = vmatmul.mubr.f32.gmra.mxu0 %v761
        %v864 = vpop.f32.mrf.mxu0
        %v865 = vadd.f32 0.0, %v864
        %v866 = vpop.f32.mrf.mxu0
        %867 = vmatprep.mubr.f32.mxu0 0.0
        %868 = vmatmul.mubr.f32.gmra.mxu0 %v762
        %v869 = vpop.f32.mrf.mxu0
        %v870 = vadd.f32 0.0, %v869
        %v871 = vpop.f32.mrf.mxu0
        %872 = vmatprep.mubr.f32.mxu0 0.0
        %873 = vmatmul.mubr.f32.gmra.mxu0 %v763
        %v874 = vpop.f32.mrf.mxu0
        %v875 = vadd.f32 0.0, %v874
        %v876 = vpop.f32.mrf.mxu0
        %877 = vmatprep.mubr.f32.mxu0 0.0
        %878 = vmatmul.mubr.f32.gmra.mxu0 %v764
        %v879 = vpop.f32.mrf.mxu0
        %v880 = vadd.f32 0.0, %v879
        %v881 = vpop.f32.mrf.mxu0
        %882 = vmatprep.mubr.f32.mxu0 0.0
        %883 = vmatmul.mubr.f32.gmra.mxu0 %v765
        %v884 = vpop.f32.mrf.mxu0
        %v885 = vadd.f32 0.0, %v884
        %v886 = vpop.f32.mrf.mxu0
        %887 = vmatprep.mubr.f32.mxu0 0.0
        %888 = vmatmul.mubr.f32.gmra.mxu0 %v766
        %v889 = vpop.f32.mrf.mxu0
        %v890 = vadd.f32 0.0, %v889
        %v891 = vpop.f32.mrf.mxu0
        %892 = vmatprep.mubr.f32.mxu0 0.0
        %893 = vmatmul.mubr.f32.gmra.mxu0 %v767
        %v894 = vpop.f32.mrf.mxu0
        %v895 = vadd.f32 0.0, %v894
        %v896 = vpop.f32.mrf.mxu0
        %897 = vmatprep.mubr.f32.mxu0 0.0
        %898 = vmatmul.mubr.f32.gmra.mxu0 %v768
        %v899 = vpop.f32.mrf.mxu0
        %v900 = vadd.f32 0.0, %v899
        %v901 = vpop.f32.mrf.mxu0
        %902 = vmatprep.mubr.f32.mxu0 0.0
        %903 = vmatmul.mubr.f32.gmra.mxu0 %v769
        %v904 = vpop.f32.mrf.mxu0
        %v905 = vadd.f32 0.0, %v904
        %v906 = vpop.f32.mrf.mxu0
        %907 = vmatprep.mubr.f32.mxu0 0.0
        %908 = vmatmul.mubr.f32.gmra.mxu0 %v770
        %v909 = vpop.f32.mrf.mxu0
        %v910 = vadd.f32 0.0, %v909
        %v911 = vpop.f32.mrf.mxu0
        %912 = vmatprep.mubr.f32.mxu0 0.0
        %913 = vmatmul.mubr.f32.gmra.mxu0 %v771
        %v914 = vpop.f32.mrf.mxu0
        %v915 = vadd.f32 0.0, %v914
        %v916 = vpop.f32.mrf.mxu0
        %917 = vmatprep.mubr.f32.mxu0 0.0
        %918 = vmatmul.mubr.f32.gmra.mxu0 %v772
        %v919 = vpop.f32.mrf.mxu0
        %v920 = vadd.f32 0.0, %v919
        %v921 = vpop.f32.mrf.mxu0
        %922 = vmatprep.mubr.f32.mxu0 0.0
        %923 = vmatmul.mubr.f32.gmra.mxu0 %v773
        %v924 = vpop.f32.mrf.mxu0
        %v925 = vadd.f32 0.0, %v924
        %v926 = vpop.f32.mrf.mxu0
        %927 = vdwg.mxu0
        %v928 = vmul.f32 %v758, %v758
        %v929 = vmul.f32 %v759, %v759
        %v930 = vmul.f32 %v760, %v760
        %v931 = vmul.f32 %v761, %v761
        %v932 = vmul.f32 %v762, %v762
        %v933 = vmul.f32 %v763, %v763
        %v934 = vmul.f32 %v764, %v764
        %v935 = vmul.f32 %v765, %v765
        %v936 = vmul.f32 %v766, %v766
        %v937 = vmul.f32 %v767, %v767
        %v938 = vmul.f32 %v768, %v768
        %v939 = vmul.f32 %v769, %v769
        %v940 = vmul.f32 %v770, %v770
        %v941 = vmul.f32 %v771, %v771
        %v942 = vmul.f32 %v772, %v772
        %v943 = vmul.f32 %v773, %v773
        %944 = vmatprep.subr.mxu0 0.0
        %945 = vmatpush1.xpose.msra.mxu0 0.0
        %946 = vmatprep.subr.mxu0 0.0
        %947 = vmatpush1.xpose.msra.mxu0 0.0
        %948 = vmatprep.subr.mxu0 0.0
        %949 = vmatpush1.xpose.msra.mxu0 0.0
        %950 = vmatprep.subr.mxu0 0.0
        %951 = vmatpush1.xpose.msra.mxu0 0.0
        %952 = vmatprep.subr.mxu0 0.0
        %953 = vmatpush1.xpose.msra.mxu0 0.0
        %954 = vmatprep.subr.mxu0 0.0
        %955 = vmatpush1.xpose.msra.mxu0 0.0
        %956 = vmatprep.subr.mxu0 0.0
        %957 = vmatpush1.xpose.msra.mxu0 0.0
        %958 = vmatprep.subr.mxu0 0.0
        %959 = vmatpush1.xpose.msra.mxu0 0.0
        %960 = vmatprep.subr.mxu0 0.0
        %961 = vmatpush1.xpose.msra.mxu0 0.0
        %962 = vmatprep.subr.mxu0 0.0
        %963 = vmatpush1.xpose.msra.mxu0 0.0
        %964 = vmatprep.subr.mxu0 0.0
        %965 = vmatpush1.xpose.msra.mxu0 0.0
        %966 = vmatprep.subr.mxu0 0.0
        %967 = vmatpush1.xpose.msra.mxu0 0.0
        %968 = vmatprep.subr.mxu0 0.0
        %969 = vmatpush1.xpose.msra.mxu0 0.0
        %970 = vmatprep.subr.mxu0 0.0
        %971 = vmatpush1.xpose.msra.mxu0 0.0
        %972 = vmatprep.subr.mxu0 0.0
        %973 = vmatpush1.xpose.msra.mxu0 0.0
        %974 = vmatprep.subr.mxu0 0.0
        %975 = vmatpush1.xpose.msra.mxu0 %v782
        %976 = vmatprep.subr.mxu0 0.0
        %977 = vmatpush2.xpose.msra.mxu0 0.0
        %978 = vmatprep.subr.mxu0 0.0
        %979 = vmatpush2.xpose.msra.mxu0 0.0
        %980 = vmatprep.subr.mxu0 0.0
        %981 = vmatpush2.xpose.msra.mxu0 0.0
        %982 = vmatprep.subr.mxu0 0.0
        %983 = vmatpush2.xpose.msra.mxu0 0.0
        %984 = vmatprep.subr.mxu0 0.0
        %985 = vmatpush2.xpose.msra.mxu0 0.0
        %986 = vmatprep.subr.mxu0 0.0
        %987 = vmatpush2.xpose.msra.mxu0 0.0
        %988 = vmatprep.subr.mxu0 0.0
        %989 = vmatpush2.xpose.msra.mxu0 0.0
        %990 = vmatprep.subr.mxu0 0.0
        %991 = vmatpush2.xpose.msra.mxu0 0.0
        %992 = vmatprep.subr.mxu0 0.0
        %993 = vmatpush2.xpose.msra.mxu0 0.0
        %994 = vmatprep.subr.mxu0 0.0
        %995 = vmatpush2.xpose.msra.mxu0 0.0
        %996 = vmatprep.subr.mxu0 0.0
        %997 = vmatpush2.xpose.msra.mxu0 0.0
        %998 = vmatprep.subr.mxu0 0.0
        %999 = vmatpush2.xpose.msra.mxu0 0.0
        %1000 = vmatprep.subr.mxu0 0.0
        %1001 = vmatpush2.xpose.msra.mxu0 0.0
        %1002 = vmatprep.subr.mxu0 0.0
        %1003 = vmatpush2.xpose.msra.mxu0 0.0
        %1004 = vmatprep.subr.mxu0 0.0
        %1005 = vmatpush2.xpose.msra.mxu0 0.0
        %1006 = vmatprep.subr.mxu0 0.0
        %1007 = vmatpush2.xpose.msra.mxu0 0.0
        %1008 = vmatprep.mubr.f32.mxu0 0.0
        %1009 = vmatmul.mubr.f32.gmra.mxu0 %v928
        %v1010 = vpop.f32.mrf.mxu0
        %v1011 = vadd.f32 0.0, %v1010
        %v1012 = vpop.f32.mrf.mxu0
        %1013 = vmatprep.mubr.f32.mxu0 0.0
        %1014 = vmatmul.mubr.f32.gmra.mxu0 %v929
        %v1015 = vpop.f32.mrf.mxu0
        %v1016 = vadd.f32 0.0, %v1015
        %v1017 = vpop.f32.mrf.mxu0
        %1018 = vmatprep.mubr.f32.mxu0 0.0
        %1019 = vmatmul.mubr.f32.gmra.mxu0 %v930
        %v1020 = vpop.f32.mrf.mxu0
        %v1021 = vadd.f32 0.0, %v1020
        %v1022 = vpop.f32.mrf.mxu0
        %1023 = vmatprep.mubr.f32.mxu0 0.0
        %1024 = vmatmul.mubr.f32.gmra.mxu0 %v931
        %v1025 = vpop.f32.mrf.mxu0
        %v1026 = vadd.f32 0.0, %v1025
        %v1027 = vpop.f32.mrf.mxu0
        %1028 = vmatprep.mubr.f32.mxu0 0.0
        %1029 = vmatmul.mubr.f32.gmra.mxu0 %v932
        %v1030 = vpop.f32.mrf.mxu0
        %v1031 = vadd.f32 0.0, %v1030
        %v1032 = vpop.f32.mrf.mxu0
        %1033 = vmatprep.mubr.f32.mxu0 0.0
        %1034 = vmatmul.mubr.f32.gmra.mxu0 %v933
        %v1035 = vpop.f32.mrf.mxu0
        %v1036 = vadd.f32 0.0, %v1035
        %v1037 = vpop.f32.mrf.mxu0
        %1038 = vmatprep.mubr.f32.mxu0 0.0
        %1039 = vmatmul.mubr.f32.gmra.mxu0 %v934
        %v1040 = vpop.f32.mrf.mxu0
        %v1041 = vadd.f32 0.0, %v1040
        %v1042 = vpop.f32.mrf.mxu0
        %1043 = vmatprep.mubr.f32.mxu0 0.0
        %1044 = vmatmul.mubr.f32.gmra.mxu0 %v935
        %v1045 = vpop.f32.mrf.mxu0
        %v1046 = vadd.f32 0.0, %v1045
        %v1047 = vpop.f32.mrf.mxu0
        %1048 = vmatprep.mubr.f32.mxu0 0.0
        %1049 = vmatmul.mubr.f32.gmra.mxu0 %v936
        %v1050 = vpop.f32.mrf.mxu0
        %v1051 = vadd.f32 0.0, %v1050
        %v1052 = vpop.f32.mrf.mxu0
        %1053 = vmatprep.mubr.f32.mxu0 0.0
        %1054 = vmatmul.mubr.f32.gmra.mxu0 %v937
        %v1055 = vpop.f32.mrf.mxu0
        %v1056 = vadd.f32 0.0, %v1055
        %v1057 = vpop.f32.mrf.mxu0
        %1058 = vmatprep.mubr.f32.mxu0 0.0
        %1059 = vmatmul.mubr.f32.gmra.mxu0 %v938
        %v1060 = vpop.f32.mrf.mxu0
        %v1061 = vadd.f32 0.0, %v1060
        %v1062 = vpop.f32.mrf.mxu0
        %1063 = vmatprep.mubr.f32.mxu0 0.0
        %1064 = vmatmul.mubr.f32.gmra.mxu0 %v939
        %v1065 = vpop.f32.mrf.mxu0
        %v1066 = vadd.f32 0.0, %v1065
        %v1067 = vpop.f32.mrf.mxu0
        %1068 = vmatprep.mubr.f32.mxu0 0.0
        %1069 = vmatmul.mubr.f32.gmra.mxu0 %v940
        %v1070 = vpop.f32.mrf.mxu0
        %v1071 = vadd.f32 0.0, %v1070
        %v1072 = vpop.f32.mrf.mxu0
        %1073 = vmatprep.mubr.f32.mxu0 0.0
        %1074 = vmatmul.mubr.f32.gmra.mxu0 %v941
        %v1075 = vpop.f32.mrf.mxu0
        %v1076 = vadd.f32 0.0, %v1075
        %v1077 = vpop.f32.mrf.mxu0
        %1078 = vmatprep.mubr.f32.mxu0 0.0
        %1079 = vmatmul.mubr.f32.gmra.mxu0 %v942
        %v1080 = vpop.f32.mrf.mxu0
        %v1081 = vadd.f32 0.0, %v1080
        %v1082 = vpop.f32.mrf.mxu0
        %1083 = vmatprep.mubr.f32.mxu0 0.0
        %1084 = vmatmul.mubr.f32.gmra.mxu0 %v943
        %v1085 = vpop.f32.mrf.mxu0
        %v1086 = vadd.f32 0.0, %v1085
        %v1087 = vpop.f32.mrf.mxu0
        %1088 = vdwg.mxu0
        %v1089 = vmul.f32 %v850, 0.015625
        %v1090 = vmul.f32 %v855, 0.015625
        %v1091 = vmul.f32 %v860, 0.015625
        %v1092 = vmul.f32 %v865, 0.015625
        %v1093 = vmul.f32 %v870, 0.015625
        %v1094 = vmul.f32 %v875, 0.015625
        %v1095 = vmul.f32 %v880, 0.015625
        %v1096 = vmul.f32 %v885, 0.015625
        %v1097 = vmul.f32 %v890, 0.015625
        %v1098 = vmul.f32 %v895, 0.015625
        %v1099 = vmul.f32 %v900, 0.015625
        %v1100 = vmul.f32 %v905, 0.015625
        %v1101 = vmul.f32 %v910, 0.015625
        %v1102 = vmul.f32 %v915, 0.015625
        %v1103 = vmul.f32 %v920, 0.015625
        %v1104 = vmul.f32 %v925, 0.015625
        %v1105 = vmul.f32 %v1011, 0.015625
        %v1106 = vmul.f32 %v1016, 0.015625
        %v1107 = vmul.f32 %v1021, 0.015625
        %v1108 = vmul.f32 %v1026, 0.015625
        %v1109 = vmul.f32 %v1031, 0.015625
        %v1110 = vmul.f32 %v1036, 0.015625
        %v1111 = vmul.f32 %v1041, 0.015625
        %v1112 = vmul.f32 %v1046, 0.015625
        %v1113 = vmul.f32 %v1051, 0.015625
        %v1114 = vmul.f32 %v1056, 0.015625
        %v1115 = vmul.f32 %v1061, 0.015625
        %v1116 = vmul.f32 %v1066, 0.015625
        %v1117 = vmul.f32 %v1071, 0.015625
        %v1118 = vmul.f32 %v1076, 0.015625
        %v1119 = vmul.f32 %v1081, 0.015625
        %v1120 = vmul.f32 %v1086, 0.015625
        %v1121 = vmul.f32 %v1089, %v1089
        %v1122 = vmul.f32 %v1090, %v1090
        %v1123 = vmul.f32 %v1091, %v1091
        %v1124 = vmul.f32 %v1092, %v1092
        %v1125 = vmul.f32 %v1093, %v1093
        %v1126 = vmul.f32 %v1094, %v1094
        %v1127 = vmul.f32 %v1095, %v1095
        %v1128 = vmul.f32 %v1096, %v1096
        %v1129 = vmul.f32 %v1097, %v1097
        %v1130 = vmul.f32 %v1098, %v1098
        %v1131 = vmul.f32 %v1099, %v1099
        %v1132 = vmul.f32 %v1100, %v1100
        %v1133 = vmul.f32 %v1101, %v1101
        %v1134 = vmul.f32 %v1102, %v1102
        %v1135 = vmul.f32 %v1103, %v1103
        %v1136 = vmul.f32 %v1104, %v1104
        %v1137 = vsub.f32 %v1105, %v1121
        %v1138 = vsub.f32 %v1106, %v1122
        %v1139 = vsub.f32 %v1107, %v1123
        %v1140 = vsub.f32 %v1108, %v1124
        %v1141 = vsub.f32 %v1109, %v1125
        %v1142 = vsub.f32 %v1110, %v1126
        %v1143 = vsub.f32 %v1111, %v1127
        %v1144 = vsub.f32 %v1112, %v1128
        %v1145 = vsub.f32 %v1113, %v1129
        %v1146 = vsub.f32 %v1114, %v1130
        %v1147 = vsub.f32 %v1115, %v1131
        %v1148 = vsub.f32 %v1116, %v1132
        %v1149 = vsub.f32 %v1117, %v1133
        %v1150 = vsub.f32 %v1118, %v1134
        %v1151 = vsub.f32 %v1119, %v1135
        %v1152 = vsub.f32 %v1120, %v1136
        %v1153 = vmax.f32 %v1137, 0.0
        %v1154 = vmax.f32 %v1138, 0.0
        %v1155 = vmax.f32 %v1139, 0.0
        %v1156 = vmax.f32 %v1140, 0.0
        %v1157 = vmax.f32 %v1141, 0.0
        %v1158 = vmax.f32 %v1142, 0.0
        %v1159 = vmax.f32 %v1143, 0.0
        %v1160 = vmax.f32 %v1144, 0.0
        %v1161 = vmax.f32 %v1145, 0.0
        %v1162 = vmax.f32 %v1146, 0.0
        %v1163 = vmax.f32 %v1147, 0.0
        %v1164 = vmax.f32 %v1148, 0.0
        %v1165 = vmax.f32 %v1149, 0.0
        %v1166 = vmax.f32 %v1150, 0.0
        %v1167 = vmax.f32 %v1151, 0.0
        %v1168 = vmax.f32 %v1152, 0.0
        %v1169 = vadd.f32 %v1153, 1e-05
        %v1170 = vadd.f32 %v1154, 1e-05
        %v1171 = vadd.f32 %v1155, 1e-05
        %v1172 = vadd.f32 %v1156, 1e-05
        %v1173 = vadd.f32 %v1157, 1e-05
        %v1174 = vadd.f32 %v1158, 1e-05
        %v1175 = vadd.f32 %v1159, 1e-05
        %v1176 = vadd.f32 %v1160, 1e-05
        %v1177 = vadd.f32 %v1161, 1e-05
        %v1178 = vadd.f32 %v1162, 1e-05
        %v1179 = vadd.f32 %v1163, 1e-05
        %v1180 = vadd.f32 %v1164, 1e-05
        %v1181 = vadd.f32 %v1165, 1e-05
        %v1182 = vadd.f32 %v1166, 1e-05
        %v1183 = vadd.f32 %v1167, 1e-05
        %v1184 = vadd.f32 %v1168, 1e-05
        %v1185 = vrsqrt.pop %v1169
        %v1186 = vrsqrt.pop %v1170
        %v1187 = vrsqrt.pop %v1171
        %v1188 = vrsqrt.pop %v1172
        %v1189 = vrsqrt.pop %v1173
        %v1190 = vrsqrt.pop %v1174
        %v1191 = vrsqrt.pop %v1175
        %v1192 = vrsqrt.pop %v1176
        %v1193 = vrsqrt.pop %v1177
        %v1194 = vrsqrt.pop %v1178
        %v1195 = vrsqrt.pop %v1179
        %v1196 = vrsqrt.pop %v1180
        %v1197 = vrsqrt.pop %v1181
        %v1198 = vrsqrt.pop %v1182
        %v1199 = vrsqrt.pop %v1183
        %v1200 = vrsqrt.pop %v1184
        %vm1201 = vcmask 15360
        %v1203 = vsel %vm1201, %v1089, 0
        %v1206 = vsel %vm1201, %v1090, 0
        %v1209 = vsel %vm1201, %v1091, 0
        %v1212 = vsel %vm1201, %v1092, 0
        %v1215 = vsel %vm1201, %v1093, 0
        %v1218 = vsel %vm1201, %v1094, 0
        %v1221 = vsel %vm1201, %v1095, 0
        %v1224 = vsel %vm1201, %v1096, 0
        %v1227 = vsel %vm1201, %v1097, 0
        %v1230 = vsel %vm1201, %v1098, 0
        %v1233 = vsel %vm1201, %v1099, 0
        %v1236 = vsel %vm1201, %v1100, 0
        %v1239 = vsel %vm1201, %v1101, 0
        %v1242 = vsel %vm1201, %v1102, 0
        %v1245 = vsel %vm1201, %v1103, 0
        %v1248 = vsel %vm1201, %v1104, 0
        %vm1250 = vcmask 1041408
        %v1252 = vsel %vm1250, %v782, 0
        %1254 = vmatprep.subr.mxu0 0.0
        %1255 = vmatpush1.msra.mxu0 0.0
        %1256 = vmatprep.subr.mxu0 0.0
        %1257 = vmatpush1.msra.mxu0 0.0
        %1258 = vmatprep.subr.mxu0 0.0
        %1259 = vmatpush1.msra.mxu0 0.0
        %1260 = vmatprep.subr.mxu0 0.0
        %1261 = vmatpush1.msra.mxu0 0.0
        %1262 = vmatprep.subr.mxu0 0.0
        %1263 = vmatpush1.msra.mxu0 0.0
        %1264 = vmatprep.subr.mxu0 0.0
        %1265 = vmatpush1.msra.mxu0 0.0
        %1266 = vmatprep.subr.mxu0 0.0
        %1267 = vmatpush1.msra.mxu0 0.0
        %1268 = vmatprep.subr.mxu0 0.0
        %1269 = vmatpush1.msra.mxu0 0.0
        %1270 = vmatprep.subr.mxu0 0.0
        %1271 = vmatpush1.msra.mxu0 0.0
        %1272 = vmatprep.subr.mxu0 0.0
        %1273 = vmatpush1.msra.mxu0 0.0
        %1274 = vmatprep.subr.mxu0 0.0
        %1275 = vmatpush1.msra.mxu0 0.0
        %1276 = vmatprep.subr.mxu0 0.0
        %1277 = vmatpush1.msra.mxu0 0.0
        %1278 = vmatprep.subr.mxu0 0.0
        %1279 = vmatpush1.msra.mxu0 0.0
        %1280 = vmatprep.subr.mxu0 0.0
        %1281 = vmatpush1.msra.mxu0 0.0
        %1282 = vmatprep.subr.mxu0 0.0
        %1283 = vmatpush1.msra.mxu0 0.0
        %1284 = vmatprep.subr.mxu0 0.0
        %1285 = vmatpush1.msra.mxu0 %v1252
        %1286 = vmatprep.subr.mxu0 0.0
        %1287 = vmatpush2.msra.mxu0 0.0
        %1288 = vmatprep.subr.mxu0 0.0
        %1289 = vmatpush2.msra.mxu0 0.0
        %1290 = vmatprep.subr.mxu0 0.0
        %1291 = vmatpush2.msra.mxu0 0.0
        %1292 = vmatprep.subr.mxu0 0.0
        %1293 = vmatpush2.msra.mxu0 0.0
        %1294 = vmatprep.subr.mxu0 0.0
        %1295 = vmatpush2.msra.mxu0 0.0
        %1296 = vmatprep.subr.mxu0 0.0
        %1297 = vmatpush2.msra.mxu0 0.0
        %1298 = vmatprep.subr.mxu0 0.0
        %1299 = vmatpush2.msra.mxu0 0.0
        %1300 = vmatprep.subr.mxu0 0.0
        %1301 = vmatpush2.msra.mxu0 0.0
        %1302 = vmatprep.subr.mxu0 0.0
        %1303 = vmatpush2.msra.mxu0 0.0
        %1304 = vmatprep.subr.mxu0 0.0
        %1305 = vmatpush2.msra.mxu0 0.0
        %1306 = vmatprep.subr.mxu0 0.0
        %1307 = vmatpush2.msra.mxu0 0.0
        %1308 = vmatprep.subr.mxu0 0.0
        %1309 = vmatpush2.msra.mxu0 0.0
        %1310 = vmatprep.subr.mxu0 0.0
        %1311 = vmatpush2.msra.mxu0 0.0
        %1312 = vmatprep.subr.mxu0 0.0
        %1313 = vmatpush2.msra.mxu0 0.0
        %1314 = vmatprep.subr.mxu0 0.0
        %1315 = vmatpush2.msra.mxu0 0.0
        %1316 = vmatprep.subr.mxu0 0.0
        %1317 = vmatpush2.msra.mxu0 0.0
        %1318 = vmatprep.mubr.f32.mxu0 0.0
        %1319 = vmatmul.mubr.f32.gmra.mxu0 %v1203
        %v1320 = vpop.f32.mrf.mxu0
        %v1321 = vadd.f32 0.0, %v1320
        %v1322 = vpop.f32.mrf.mxu0
        %1323 = vmatprep.mubr.f32.mxu0 0.0
        %1324 = vmatmul.mubr.f32.gmra.mxu0 %v1206
        %v1325 = vpop.f32.mrf.mxu0
        %v1326 = vadd.f32 0.0, %v1325
        %v1327 = vpop.f32.mrf.mxu0
        %1328 = vmatprep.mubr.f32.mxu0 0.0
        %1329 = vmatmul.mubr.f32.gmra.mxu0 %v1209
        %v1330 = vpop.f32.mrf.mxu0
        %v1331 = vadd.f32 0.0, %v1330
        %v1332 = vpop.f32.mrf.mxu0
        %1333 = vmatprep.mubr.f32.mxu0 0.0
        %1334 = vmatmul.mubr.f32.gmra.mxu0 %v1212
        %v1335 = vpop.f32.mrf.mxu0
        %v1336 = vadd.f32 0.0, %v1335
        %v1337 = vpop.f32.mrf.mxu0
        %1338 = vmatprep.mubr.f32.mxu0 0.0
        %1339 = vmatmul.mubr.f32.gmra.mxu0 %v1215
        %v1340 = vpop.f32.mrf.mxu0
        %v1341 = vadd.f32 0.0, %v1340
        %v1342 = vpop.f32.mrf.mxu0
        %1343 = vmatprep.mubr.f32.mxu0 0.0
        %1344 = vmatmul.mubr.f32.gmra.mxu0 %v1218
        %v1345 = vpop.f32.mrf.mxu0
        %v1346 = vadd.f32 0.0, %v1345
        %v1347 = vpop.f32.mrf.mxu0
        %1348 = vmatprep.mubr.f32.mxu0 0.0
        %1349 = vmatmul.mubr.f32.gmra.mxu0 %v1221
        %v1350 = vpop.f32.mrf.mxu0
        %v1351 = vadd.f32 0.0, %v1350
        %v1352 = vpop.f32.mrf.mxu0
        %1353 = vmatprep.mubr.f32.mxu0 0.0
        %1354 = vmatmul.mubr.f32.gmra.mxu0 %v1224
        %v1355 = vpop.f32.mrf.mxu0
        %v1356 = vadd.f32 0.0, %v1355
        %v1357 = vpop.f32.mrf.mxu0
        %1358 = vmatprep.mubr.f32.mxu0 0.0
        %1359 = vmatmul.mubr.f32.gmra.mxu0 %v1227
        %v1360 = vpop.f32.mrf.mxu0
        %v1361 = vadd.f32 0.0, %v1360
        %v1362 = vpop.f32.mrf.mxu0
        %1363 = vmatprep.mubr.f32.mxu0 0.0
        %1364 = vmatmul.mubr.f32.gmra.mxu0 %v1230
        %v1365 = vpop.f32.mrf.mxu0
        %v1366 = vadd.f32 0.0, %v1365
        %v1367 = vpop.f32.mrf.mxu0
        %1368 = vmatprep.mubr.f32.mxu0 0.0
        %1369 = vmatmul.mubr.f32.gmra.mxu0 %v1233
        %v1370 = vpop.f32.mrf.mxu0
        %v1371 = vadd.f32 0.0, %v1370
        %v1372 = vpop.f32.mrf.mxu0
        %1373 = vmatprep.mubr.f32.mxu0 0.0
        %1374 = vmatmul.mubr.f32.gmra.mxu0 %v1236
        %v1375 = vpop.f32.mrf.mxu0
        %v1376 = vadd.f32 0.0, %v1375
        %v1377 = vpop.f32.mrf.mxu0
        %1378 = vmatprep.mubr.f32.mxu0 0.0
        %1379 = vmatmul.mubr.f32.gmra.mxu0 %v1239
        %v1380 = vpop.f32.mrf.mxu0
        %v1381 = vadd.f32 0.0, %v1380
        %v1382 = vpop.f32.mrf.mxu0
        %1383 = vmatprep.mubr.f32.mxu0 0.0
        %1384 = vmatmul.mubr.f32.gmra.mxu0 %v1242
        %v1385 = vpop.f32.mrf.mxu0
        %v1386 = vadd.f32 0.0, %v1385
        %v1387 = vpop.f32.mrf.mxu0
        %1388 = vmatprep.mubr.f32.mxu0 0.0
        %1389 = vmatmul.mubr.f32.gmra.mxu0 %v1245
        %v1390 = vpop.f32.mrf.mxu0
        %v1391 = vadd.f32 0.0, %v1390
        %v1392 = vpop.f32.mrf.mxu0
        %1393 = vmatprep.mubr.f32.mxu0 0.0
        %1394 = vmatmul.mubr.f32.gmra.mxu0 %v1248
        %v1395 = vpop.f32.mrf.mxu0
        %v1396 = vadd.f32 0.0, %v1395
        %v1397 = vpop.f32.mrf.mxu0
        %1398 = vdwg.mxu0
        %v1400 = vsel %vm1201, %v1185, 0
        %v1403 = vsel %vm1201, %v1186, 0
        %v1406 = vsel %vm1201, %v1187, 0
        %v1409 = vsel %vm1201, %v1188, 0
        %v1412 = vsel %vm1201, %v1189, 0
        %v1415 = vsel %vm1201, %v1190, 0
        %v1418 = vsel %vm1201, %v1191, 0
        %v1421 = vsel %vm1201, %v1192, 0
        %v1424 = vsel %vm1201, %v1193, 0
        %v1427 = vsel %vm1201, %v1194, 0
        %v1430 = vsel %vm1201, %v1195, 0
        %v1433 = vsel %vm1201, %v1196, 0
        %v1436 = vsel %vm1201, %v1197, 0
        %v1439 = vsel %vm1201, %v1198, 0
        %v1442 = vsel %vm1201, %v1199, 0
        %v1445 = vsel %vm1201, %v1200, 0
        %1447 = vmatprep.subr.mxu0 0.0
        %1448 = vmatpush1.msra.mxu0 0.0
        %1449 = vmatprep.subr.mxu0 0.0
        %1450 = vmatpush1.msra.mxu0 0.0
        %1451 = vmatprep.subr.mxu0 0.0
        %1452 = vmatpush1.msra.mxu0 0.0
        %1453 = vmatprep.subr.mxu0 0.0
        %1454 = vmatpush1.msra.mxu0 0.0
        %1455 = vmatprep.subr.mxu0 0.0
        %1456 = vmatpush1.msra.mxu0 0.0
        %1457 = vmatprep.subr.mxu0 0.0
        %1458 = vmatpush1.msra.mxu0 0.0
        %1459 = vmatprep.subr.mxu0 0.0
        %1460 = vmatpush1.msra.mxu0 0.0
        %1461 = vmatprep.subr.mxu0 0.0
        %1462 = vmatpush1.msra.mxu0 0.0
        %1463 = vmatprep.subr.mxu0 0.0
        %1464 = vmatpush1.msra.mxu0 0.0
        %1465 = vmatprep.subr.mxu0 0.0
        %1466 = vmatpush1.msra.mxu0 0.0
        %1467 = vmatprep.subr.mxu0 0.0
        %1468 = vmatpush1.msra.mxu0 0.0
        %1469 = vmatprep.subr.mxu0 0.0
        %1470 = vmatpush1.msra.mxu0 0.0
        %1471 = vmatprep.subr.mxu0 0.0
        %1472 = vmatpush1.msra.mxu0 0.0
        %1473 = vmatprep.subr.mxu0 0.0
        %1474 = vmatpush1.msra.mxu0 0.0
        %1475 = vmatprep.subr.mxu0 0.0
        %1476 = vmatpush1.msra.mxu0 0.0
        %1477 = vmatprep.subr.mxu0 0.0
        %1478 = vmatpush1.msra.mxu0 %v1252
        %1479 = vmatprep.subr.mxu0 0.0
        %1480 = vmatpush2.msra.mxu0 0.0
        %1481 = vmatprep.subr.mxu0 0.0
        %1482 = vmatpush2.msra.mxu0 0.0
        %1483 = vmatprep.subr.mxu0 0.0
        %1484 = vmatpush2.msra.mxu0 0.0
        %1485 = vmatprep.subr.mxu0 0.0
        %1486 = vmatpush2.msra.mxu0 0.0
        %1487 = vmatprep.subr.mxu0 0.0
        %1488 = vmatpush2.msra.mxu0 0.0
        %1489 = vmatprep.subr.mxu0 0.0
        %1490 = vmatpush2.msra.mxu0 0.0
        %1491 = vmatprep.subr.mxu0 0.0
        %1492 = vmatpush2.msra.mxu0 0.0
        %1493 = vmatprep.subr.mxu0 0.0
        %1494 = vmatpush2.msra.mxu0 0.0
        %1495 = vmatprep.subr.mxu0 0.0
        %1496 = vmatpush2.msra.mxu0 0.0
        %1497 = vmatprep.subr.mxu0 0.0
        %1498 = vmatpush2.msra.mxu0 0.0
        %1499 = vmatprep.subr.mxu0 0.0
        %1500 = vmatpush2.msra.mxu0 0.0
        %1501 = vmatprep.subr.mxu0 0.0
        %1502 = vmatpush2.msra.mxu0 0.0
        %1503 = vmatprep.subr.mxu0 0.0
        %1504 = vmatpush2.msra.mxu0 0.0
        %1505 = vmatprep.subr.mxu0 0.0
        %1506 = vmatpush2.msra.mxu0 0.0
        %1507 = vmatprep.subr.mxu0 0.0
        %1508 = vmatpush2.msra.mxu0 0.0
        %1509 = vmatprep.subr.mxu0 0.0
        %1510 = vmatpush2.msra.mxu0 0.0
        %1511 = vmatprep.mubr.f32.mxu0 0.0
        %1512 = vmatmul.mubr.f32.gmra.mxu0 %v1400
        %v1513 = vpop.f32.mrf.mxu0
        %v1514 = vadd.f32 0.0, %v1513
        %v1515 = vpop.f32.mrf.mxu0
        %1516 = vmatprep.mubr.f32.mxu0 0.0
        %1517 = vmatmul.mubr.f32.gmra.mxu0 %v1403
        %v1518 = vpop.f32.mrf.mxu0
        %v1519 = vadd.f32 0.0, %v1518
        %v1520 = vpop.f32.mrf.mxu0
        %1521 = vmatprep.mubr.f32.mxu0 0.0
        %1522 = vmatmul.mubr.f32.gmra.mxu0 %v1406
        %v1523 = vpop.f32.mrf.mxu0
        %v1524 = vadd.f32 0.0, %v1523
        %v1525 = vpop.f32.mrf.mxu0
        %1526 = vmatprep.mubr.f32.mxu0 0.0
        %1527 = vmatmul.mubr.f32.gmra.mxu0 %v1409
        %v1528 = vpop.f32.mrf.mxu0
        %v1529 = vadd.f32 0.0, %v1528
        %v1530 = vpop.f32.mrf.mxu0
        %1531 = vmatprep.mubr.f32.mxu0 0.0
        %1532 = vmatmul.mubr.f32.gmra.mxu0 %v1412
        %v1533 = vpop.f32.mrf.mxu0
        %v1534 = vadd.f32 0.0, %v1533
        %v1535 = vpop.f32.mrf.mxu0
        %1536 = vmatprep.mubr.f32.mxu0 0.0
        %1537 = vmatmul.mubr.f32.gmra.mxu0 %v1415
        %v1538 = vpop.f32.mrf.mxu0
        %v1539 = vadd.f32 0.0, %v1538
        %v1540 = vpop.f32.mrf.mxu0
        %1541 = vmatprep.mubr.f32.mxu0 0.0
        %1542 = vmatmul.mubr.f32.gmra.mxu0 %v1418
        %v1543 = vpop.f32.mrf.mxu0
        %v1544 = vadd.f32 0.0, %v1543
        %v1545 = vpop.f32.mrf.mxu0
        %1546 = vmatprep.mubr.f32.mxu0 0.0
        %1547 = vmatmul.mubr.f32.gmra.mxu0 %v1421
        %v1548 = vpop.f32.mrf.mxu0
        %v1549 = vadd.f32 0.0, %v1548
        %v1550 = vpop.f32.mrf.mxu0
        %1551 = vmatprep.mubr.f32.mxu0 0.0
        %1552 = vmatmul.mubr.f32.gmra.mxu0 %v1424
        %v1553 = vpop.f32.mrf.mxu0
        %v1554 = vadd.f32 0.0, %v1553
        %v1555 = vpop.f32.mrf.mxu0
        %1556 = vmatprep.mubr.f32.mxu0 0.0
        %1557 = vmatmul.mubr.f32.gmra.mxu0 %v1427
        %v1558 = vpop.f32.mrf.mxu0
        %v1559 = vadd.f32 0.0, %v1558
        %v1560 = vpop.f32.mrf.mxu0
        %1561 = vmatprep.mubr.f32.mxu0 0.0
        %1562 = vmatmul.mubr.f32.gmra.mxu0 %v1430
        %v1563 = vpop.f32.mrf.mxu0
        %v1564 = vadd.f32 0.0, %v1563
        %v1565 = vpop.f32.mrf.mxu0
        %1566 = vmatprep.mubr.f32.mxu0 0.0
        %1567 = vmatmul.mubr.f32.gmra.mxu0 %v1433
        %v1568 = vpop.f32.mrf.mxu0
        %v1569 = vadd.f32 0.0, %v1568
        %v1570 = vpop.f32.mrf.mxu0
        %1571 = vmatprep.mubr.f32.mxu0 0.0
        %1572 = vmatmul.mubr.f32.gmra.mxu0 %v1436
        %v1573 = vpop.f32.mrf.mxu0
        %v1574 = vadd.f32 0.0, %v1573
        %v1575 = vpop.f32.mrf.mxu0
        %1576 = vmatprep.mubr.f32.mxu0 0.0
        %1577 = vmatmul.mubr.f32.gmra.mxu0 %v1439
        %v1578 = vpop.f32.mrf.mxu0
        %v1579 = vadd.f32 0.0, %v1578
        %v1580 = vpop.f32.mrf.mxu0
        %1581 = vmatprep.mubr.f32.mxu0 0.0
        %1582 = vmatmul.mubr.f32.gmra.mxu0 %v1442
        %v1583 = vpop.f32.mrf.mxu0
        %v1584 = vadd.f32 0.0, %v1583
        %v1585 = vpop.f32.mrf.mxu0
        %1586 = vmatprep.mubr.f32.mxu0 0.0
        %1587 = vmatmul.mubr.f32.gmra.mxu0 %v1445
        %v1588 = vpop.f32.mrf.mxu0
        %v1589 = vadd.f32 0.0, %v1588
        %v1590 = vpop.f32.mrf.mxu0
        %1591 = vdwg.mxu0
        %v1592 = vsub.f32 %v758, %v1321
        %v1593 = vsub.f32 %v759, %v1326
        %v1594 = vsub.f32 %v760, %v1331
        %v1595 = vsub.f32 %v761, %v1336
        %v1596 = vsub.f32 %v762, %v1341
        %v1597 = vsub.f32 %v763, %v1346
        %v1598 = vsub.f32 %v764, %v1351
        %v1599 = vsub.f32 %v765, %v1356
        %v1600 = vsub.f32 %v766, %v1361
        %v1601 = vsub.f32 %v767, %v1366
        %v1602 = vsub.f32 %v768, %v1371
        %v1603 = vsub.f32 %v769, %v1376
        %v1604 = vsub.f32 %v770, %v1381
        %v1605 = vsub.f32 %v771, %v1386
        %v1606 = vsub.f32 %v772, %v1391
        %v1607 = vsub.f32 %v773, %v1396
        %v1608 = vmul.f32 %v1592, %v1514
        %v1609 = vmul.f32 %v1593, %v1519
        %v1610 = vmul.f32 %v1594, %v1524
        %v1611 = vmul.f32 %v1595, %v1529
        %v1612 = vmul.f32 %v1596, %v1534
        %v1613 = vmul.f32 %v1597, %v1539
        %v1614 = vmul.f32 %v1598, %v1544
        %v1615 = vmul.f32 %v1599, %v1549
        %v1616 = vmul.f32 %v1600, %v1554
        %v1617 = vmul.f32 %v1601, %v1559
        %v1618 = vmul.f32 %v1602, %v1564
        %v1619 = vmul.f32 %v1603, %v1569
        %v1620 = vmul.f32 %v1604, %v1574
        %v1621 = vmul.f32 %v1605, %v1579
        %v1622 = vmul.f32 %v1606, %v1584
        %v1623 = vmul.f32 %v1607, %v1589
        %v1624 = vlaneseq
        %v1625 = vshrl.u32 %v1624, 7
        %v1626 = vsub.s32 0, %v1625
        %v1627 = vrot.slane %v302, %v1626
        %v1628 = vmul.f32 %v1608, %v1627
        %v1629 = vmul.f32 %v1609, %v1627
        %v1630 = vmul.f32 %v1610, %v1627
        %v1631 = vmul.f32 %v1611, %v1627
        %v1632 = vmul.f32 %v1612, %v1627
        %v1633 = vmul.f32 %v1613, %v1627
        %v1634 = vmul.f32 %v1614, %v1627
        %v1635 = vmul.f32 %v1615, %v1627
        %v1636 = vmul.f32 %v1616, %v1627
        %v1637 = vmul.f32 %v1617, %v1627
        %v1638 = vmul.f32 %v1618, %v1627
        %v1639 = vmul.f32 %v1619, %v1627
        %v1640 = vmul.f32 %v1620, %v1627
        %v1641 = vmul.f32 %v1621, %v1627
        %v1642 = vmul.f32 %v1622, %v1627
        %v1643 = vmul.f32 %v1623, %v1627
        %v1644 = vlaneseq
        %v1645 = vshrl.u32 %v1644, 7
        %v1646 = vsub.s32 0, %v1645
        %v1647 = vrot.slane %v303, %v1646
        %v1648 = vadd.f32 %v1628, %v1647
        %v1649 = vadd.f32 %v1629, %v1647
        %v1650 = vadd.f32 %v1630, %v1647
        %v1651 = vadd.f32 %v1631, %v1647
        %v1652 = vadd.f32 %v1632, %v1647
        %v1653 = vadd.f32 %v1633, %v1647
        %v1654 = vadd.f32 %v1634, %v1647
        %v1655 = vadd.f32 %v1635, %v1647
        %v1656 = vadd.f32 %v1636, %v1647
        %v1657 = vadd.f32 %v1637, %v1647
        %v1658 = vadd.f32 %v1638, %v1647
        %v1659 = vadd.f32 %v1639, %v1647
        %v1660 = vadd.f32 %v1640, %v1647
        %v1661 = vadd.f32 %v1641, %v1647
        %v1662 = vadd.f32 %v1642, %v1647
        %v1663 = vadd.f32 %v1643, %v1647
        %v1664 = vmax.f32 %v1648, 0.0
        %v1665 = vmax.f32 %v1649, 0.0
        %v1666 = vmax.f32 %v1650, 0.0
        %v1667 = vmax.f32 %v1651, 0.0
        %v1668 = vmax.f32 %v1652, 0.0
        %v1669 = vmax.f32 %v1653, 0.0
        %v1670 = vmax.f32 %v1654, 0.0
        %v1671 = vmax.f32 %v1655, 0.0
        %v1672 = vmax.f32 %v1656, 0.0
        %v1673 = vmax.f32 %v1657, 0.0
        %v1674 = vmax.f32 %v1658, 0.0
        %v1675 = vmax.f32 %v1659, 0.0
        %v1676 = vmax.f32 %v1660, 0.0
        %v1677 = vmax.f32 %v1661, 0.0
        %v1678 = vmax.f32 %v1662, 0.0
        %v1679 = vmax.f32 %v1663, 0.0
        %v1680 = vld [vmem:[%s4] sm:$0xff]
        %v1681 = vld [vmem:[%s4 + $0x8] sm:$0xff]
        %v1682 = vld [vmem:[%s4 + $0x10] sm:$0xff]
        %v1683 = vld [vmem:[%s4 + $0x18] sm:$0xff]
        %v1684 = vld [vmem:[%s4 + $0x20] sm:$0xff]
        %v1685 = vld [vmem:[%s4 + $0x28] sm:$0xff]
        %v1686 = vld [vmem:[%s4 + $0x30] sm:$0xff]
        %v1687 = vld [vmem:[%s4 + $0x38] sm:$0xff]
        %v1688 = vld [vmem:[%s4 + $0x40] sm:$0xff]
        %v1689 = vld [vmem:[%s4 + $0x48] sm:$0xff]
        %v1690 = vld [vmem:[%s4 + $0x50] sm:$0xff]
        %v1691 = vld [vmem:[%s4 + $0x58] sm:$0xff]
        %v1692 = vld [vmem:[%s4 + $0x60] sm:$0xff]
        %v1693 = vld [vmem:[%s4 + $0x68] sm:$0xff]
        %v1694 = vld [vmem:[%s4 + $0x70] sm:$0xff]
        %v1695 = vld [vmem:[%s4 + $0x78] sm:$0xff]
        %v1696 = vlaneseq
        %v1697 = vshrl.u32 %v1696, 7
        %v1698 = vsub.s32 0, %v1697
        %v1699 = vrot.slane %v304, %v1698
        %1700 = vmatprep.subr.mxu0 0.0
        %1701 = vmatpush1.msra.mxu0 %v1695
        %1702 = vmatprep.subr.mxu0 0.0
        %1703 = vmatpush1.msra.mxu0 %v1694
        %1704 = vmatprep.subr.mxu0 0.0
        %1705 = vmatpush1.msra.mxu0 %v1693
        %1706 = vmatprep.subr.mxu0 0.0
        %1707 = vmatpush1.msra.mxu0 %v1692
        %1708 = vmatprep.subr.mxu0 0.0
        %1709 = vmatpush1.msra.mxu0 %v1691
        %1710 = vmatprep.subr.mxu0 0.0
        %1711 = vmatpush1.msra.mxu0 %v1690
        %1712 = vmatprep.subr.mxu0 0.0
        %1713 = vmatpush1.msra.mxu0 %v1689
        %1714 = vmatprep.subr.mxu0 0.0
        %1715 = vmatpush1.msra.mxu0 %v1688
        %1716 = vmatprep.subr.mxu0 0.0
        %1717 = vmatpush1.msra.mxu0 %v1687
        %1718 = vmatprep.subr.mxu0 0.0
        %1719 = vmatpush1.msra.mxu0 %v1686
        %1720 = vmatprep.subr.mxu0 0.0
        %1721 = vmatpush1.msra.mxu0 %v1685
        %1722 = vmatprep.subr.mxu0 0.0
        %1723 = vmatpush1.msra.mxu0 %v1684
        %1724 = vmatprep.subr.mxu0 0.0
        %1725 = vmatpush1.msra.mxu0 %v1683
        %1726 = vmatprep.subr.mxu0 0.0
        %1727 = vmatpush1.msra.mxu0 %v1682
        %1728 = vmatprep.subr.mxu0 0.0
        %1729 = vmatpush1.msra.mxu0 %v1681
        %1730 = vmatprep.subr.mxu0 0.0
        %1731 = vmatpush1.msra.mxu0 %v1680
        %1732 = vmatprep.subr.mxu0 0.0
        %1733 = vmatpush2.msra.mxu0 0.0
        %1734 = vmatprep.subr.mxu0 0.0
        %1735 = vmatpush2.msra.mxu0 0.0
        %1736 = vmatprep.subr.mxu0 0.0
        %1737 = vmatpush2.msra.mxu0 0.0
        %1738 = vmatprep.subr.mxu0 0.0
        %1739 = vmatpush2.msra.mxu0 0.0
        %1740 = vmatprep.subr.mxu0 0.0
        %1741 = vmatpush2.msra.mxu0 0.0
        %1742 = vmatprep.subr.mxu0 0.0
        %1743 = vmatpush2.msra.mxu0 0.0
        %1744 = vmatprep.subr.mxu0 0.0
        %1745 = vmatpush2.msra.mxu0 0.0
        %1746 = vmatprep.subr.mxu0 0.0
        %1747 = vmatpush2.msra.mxu0 0.0
        %1748 = vmatprep.subr.mxu0 0.0
        %1749 = vmatpush2.msra.mxu0 0.0
        %1750 = vmatprep.subr.mxu0 0.0
        %1751 = vmatpush2.msra.mxu0 0.0
        %1752 = vmatprep.subr.mxu0 0.0
        %1753 = vmatpush2.msra.mxu0 0.0
        %1754 = vmatprep.subr.mxu0 0.0
        %1755 = vmatpush2.msra.mxu0 0.0
        %1756 = vmatprep.subr.mxu0 0.0
        %1757 = vmatpush2.msra.mxu0 0.0
        %1758 = vmatprep.subr.mxu0 0.0
        %1759 = vmatpush2.msra.mxu0 0.0
        %1760 = vmatprep.subr.mxu0 0.0
        %1761 = vmatpush2.msra.mxu0 0.0
        %1762 = vmatprep.subr.mxu0 0.0
        %1763 = vmatpush2.msra.mxu0 0.0
        %1764 = vmatprep.mubr.f32.mxu0 0.0
        %1765 = vmatmul.mubr.f32.gmra.mxu0 %v1664
        %v1766 = vpop.f32.mrf.mxu0
        %v1767 = vadd.f32 %v1699, %v1766
        %v1768 = vpop.f32.mrf.mxu0
        %1769 = vmatprep.mubr.f32.mxu0 0.0
        %1770 = vmatmul.mubr.f32.gmra.mxu0 %v1665
        %v1771 = vpop.f32.mrf.mxu0
        %v1772 = vadd.f32 %v1699, %v1771
        %v1773 = vpop.f32.mrf.mxu0
        %1774 = vmatprep.mubr.f32.mxu0 0.0
        %1775 = vmatmul.mubr.f32.gmra.mxu0 %v1666
        %v1776 = vpop.f32.mrf.mxu0
        %v1777 = vadd.f32 %v1699, %v1776
        %v1778 = vpop.f32.mrf.mxu0
        %1779 = vmatprep.mubr.f32.mxu0 0.0
        %1780 = vmatmul.mubr.f32.gmra.mxu0 %v1667
        %v1781 = vpop.f32.mrf.mxu0
        %v1782 = vadd.f32 %v1699, %v1781
        %v1783 = vpop.f32.mrf.mxu0
        %1784 = vmatprep.mubr.f32.mxu0 0.0
        %1785 = vmatmul.mubr.f32.gmra.mxu0 %v1668
        %v1786 = vpop.f32.mrf.mxu0
        %v1787 = vadd.f32 %v1699, %v1786
        %v1788 = vpop.f32.mrf.mxu0
        %1789 = vmatprep.mubr.f32.mxu0 0.0
        %1790 = vmatmul.mubr.f32.gmra.mxu0 %v1669
        %v1791 = vpop.f32.mrf.mxu0
        %v1792 = vadd.f32 %v1699, %v1791
        %v1793 = vpop.f32.mrf.mxu0
        %1794 = vmatprep.mubr.f32.mxu0 0.0
        %1795 = vmatmul.mubr.f32.gmra.mxu0 %v1670
        %v1796 = vpop.f32.mrf.mxu0
        %v1797 = vadd.f32 %v1699, %v1796
        %v1798 = vpop.f32.mrf.mxu0
        %1799 = vmatprep.mubr.f32.mxu0 0.0
        %1800 = vmatmul.mubr.f32.gmra.mxu0 %v1671
        %v1801 = vpop.f32.mrf.mxu0
        %v1802 = vadd.f32 %v1699, %v1801
        %v1803 = vpop.f32.mrf.mxu0
        %1804 = vmatprep.mubr.f32.mxu0 0.0
        %1805 = vmatmul.mubr.f32.gmra.mxu0 %v1672
        %v1806 = vpop.f32.mrf.mxu0
        %v1807 = vadd.f32 %v1699, %v1806
        %v1808 = vpop.f32.mrf.mxu0
        %1809 = vmatprep.mubr.f32.mxu0 0.0
        %1810 = vmatmul.mubr.f32.gmra.mxu0 %v1673
        %v1811 = vpop.f32.mrf.mxu0
        %v1812 = vadd.f32 %v1699, %v1811
        %v1813 = vpop.f32.mrf.mxu0
        %1814 = vmatprep.mubr.f32.mxu0 0.0
        %1815 = vmatmul.mubr.f32.gmra.mxu0 %v1674
        %v1816 = vpop.f32.mrf.mxu0
        %v1817 = vadd.f32 %v1699, %v1816
        %v1818 = vpop.f32.mrf.mxu0
        %1819 = vmatprep.mubr.f32.mxu0 0.0
        %1820 = vmatmul.mubr.f32.gmra.mxu0 %v1675
        %v1821 = vpop.f32.mrf.mxu0
        %v1822 = vadd.f32 %v1699, %v1821
        %v1823 = vpop.f32.mrf.mxu0
        %1824 = vmatprep.mubr.f32.mxu0 0.0
        %1825 = vmatmul.mubr.f32.gmra.mxu0 %v1676
        %v1826 = vpop.f32.mrf.mxu0
        %v1827 = vadd.f32 %v1699, %v1826
        %v1828 = vpop.f32.mrf.mxu0
        %1829 = vmatprep.mubr.f32.mxu0 0.0
        %1830 = vmatmul.mubr.f32.gmra.mxu0 %v1677
        %v1831 = vpop.f32.mrf.mxu0
        %v1832 = vadd.f32 %v1699, %v1831
        %v1833 = vpop.f32.mrf.mxu0
        %1834 = vmatprep.mubr.f32.mxu0 0.0
        %1835 = vmatmul.mubr.f32.gmra.mxu0 %v1678
        %v1836 = vpop.f32.mrf.mxu0
        %v1837 = vadd.f32 %v1699, %v1836
        %v1838 = vpop.f32.mrf.mxu0
        %1839 = vmatprep.mubr.f32.mxu0 0.0
        %1840 = vmatmul.mubr.f32.gmra.mxu0 %v1679
        %v1841 = vpop.f32.mrf.mxu0
        %v1842 = vadd.f32 %v1699, %v1841
        %v1843 = vpop.f32.mrf.mxu0
        %1844 = vdwg.mxu0
        %v1845 = vmax.f32 %v1767, 0.0
        %v1846 = vmax.f32 %v1772, 0.0
        %v1847 = vmax.f32 %v1777, 0.0
        %v1848 = vmax.f32 %v1782, 0.0
        %v1849 = vmax.f32 %v1787, 0.0
        %v1850 = vmax.f32 %v1792, 0.0
        %v1851 = vmax.f32 %v1797, 0.0
        %v1852 = vmax.f32 %v1802, 0.0
        %v1853 = vmax.f32 %v1807, 0.0
        %v1854 = vmax.f32 %v1812, 0.0
        %v1855 = vmax.f32 %v1817, 0.0
        %v1856 = vmax.f32 %v1822, 0.0
        %v1857 = vmax.f32 %v1827, 0.0
        %v1858 = vmax.f32 %v1832, 0.0
        %v1859 = vmax.f32 %v1837, 0.0
        %v1860 = vmax.f32 %v1842, 0.0
        %vm1861 = vcmp.ge.s32.totalorder %v777, 32
        %v1862 = vsel %vm1861, 1, 0
        %vm1863 = vcmp.eq.s32.totalorder %v1862, %v775
        %v1864 = vsel %vm1863, 1, 0
        %v1865 = vcvt.s32.f32 %v1864
        %vm1866 = vcmask 523264
        %v1868 = vsel %vm1866, %v1845, 0
        %v1871 = vsel %vm1866, %v1846, 0
        %v1874 = vsel %vm1866, %v1847, 0
        %v1877 = vsel %vm1866, %v1848, 0
        %v1880 = vsel %vm1866, %v1849, 0
        %v1883 = vsel %vm1866, %v1850, 0
        %v1886 = vsel %vm1866, %v1851, 0
        %v1889 = vsel %vm1866, %v1852, 0
        %v1892 = vsel %vm1866, %v1853, 0
        %v1895 = vsel %vm1866, %v1854, 0
        %v1898 = vsel %vm1866, %v1855, 0
        %v1901 = vsel %vm1866, %v1856, 0
        %v1904 = vsel %vm1866, %v1857, 0
        %v1907 = vsel %vm1866, %v1858, 0
        %v1910 = vsel %vm1866, %v1859, 0
        %v1913 = vsel %vm1866, %v1860, 0
        %v1916 = vsel %vm1866, %v1865, 0
        %1918 = vmatprep.subr.mxu0 0.0
        %1919 = vmatpush1.xpose.msra.mxu0 0.0
        %1920 = vmatprep.subr.mxu0 0.0
        %1921 = vmatpush1.xpose.msra.mxu0 0.0
        %1922 = vmatprep.subr.mxu0 0.0
        %1923 = vmatpush1.xpose.msra.mxu0 0.0
        %1924 = vmatprep.subr.mxu0 0.0
        %1925 = vmatpush1.xpose.msra.mxu0 0.0
        %1926 = vmatprep.subr.mxu0 0.0
        %1927 = vmatpush1.xpose.msra.mxu0 0.0
        %1928 = vmatprep.subr.mxu0 0.0
        %1929 = vmatpush1.xpose.msra.mxu0 0.0
        %1930 = vmatprep.subr.mxu0 0.0
        %1931 = vmatpush1.xpose.msra.mxu0 0.0
        %1932 = vmatprep.subr.mxu0 0.0
        %1933 = vmatpush1.xpose.msra.mxu0 0.0
        %1934 = vmatprep.subr.mxu0 0.0
        %1935 = vmatpush1.xpose.msra.mxu0 0.0
        %1936 = vmatprep.subr.mxu0 0.0
        %1937 = vmatpush1.xpose.msra.mxu0 0.0
        %1938 = vmatprep.subr.mxu0 0.0
        %1939 = vmatpush1.xpose.msra.mxu0 0.0
        %1940 = vmatprep.subr.mxu0 0.0
        %1941 = vmatpush1.xpose.msra.mxu0 0.0
        %1942 = vmatprep.subr.mxu0 0.0
        %1943 = vmatpush1.xpose.msra.mxu0 0.0
        %1944 = vmatprep.subr.mxu0 0.0
        %1945 = vmatpush1.xpose.msra.mxu0 0.0
        %1946 = vmatprep.subr.mxu0 0.0
        %1947 = vmatpush1.xpose.msra.mxu0 0.0
        %1948 = vmatprep.subr.mxu0 0.0
        %1949 = vmatpush1.xpose.msra.mxu0 %v1916
        %1950 = vmatprep.subr.mxu0 0.0
        %1951 = vmatpush2.xpose.msra.mxu0 0.0
        %1952 = vmatprep.subr.mxu0 0.0
        %1953 = vmatpush2.xpose.msra.mxu0 0.0
        %1954 = vmatprep.subr.mxu0 0.0
        %1955 = vmatpush2.xpose.msra.mxu0 0.0
        %1956 = vmatprep.subr.mxu0 0.0
        %1957 = vmatpush2.xpose.msra.mxu0 0.0
        %1958 = vmatprep.subr.mxu0 0.0
        %1959 = vmatpush2.xpose.msra.mxu0 0.0
        %1960 = vmatprep.subr.mxu0 0.0
        %1961 = vmatpush2.xpose.msra.mxu0 0.0
        %1962 = vmatprep.subr.mxu0 0.0
        %1963 = vmatpush2.xpose.msra.mxu0 0.0
        %1964 = vmatprep.subr.mxu0 0.0
        %1965 = vmatpush2.xpose.msra.mxu0 0.0
        %1966 = vmatprep.subr.mxu0 0.0
        %1967 = vmatpush2.xpose.msra.mxu0 0.0
        %1968 = vmatprep.subr.mxu0 0.0
        %1969 = vmatpush2.xpose.msra.mxu0 0.0
        %1970 = vmatprep.subr.mxu0 0.0
        %1971 = vmatpush2.xpose.msra.mxu0 0.0
        %1972 = vmatprep.subr.mxu0 0.0
        %1973 = vmatpush2.xpose.msra.mxu0 0.0
        %1974 = vmatprep.subr.mxu0 0.0
        %1975 = vmatpush2.xpose.msra.mxu0 0.0
        %1976 = vmatprep.subr.mxu0 0.0
        %1977 = vmatpush2.xpose.msra.mxu0 0.0
        %1978 = vmatprep.subr.mxu0 0.0
        %1979 = vmatpush2.xpose.msra.mxu0 0.0
        %1980 = vmatprep.subr.mxu0 0.0
        %1981 = vmatpush2.xpose.msra.mxu0 0.0
        %1982 = vmatprep.mubr.f32.mxu0 0.0
        %1983 = vmatmul.mubr.f32.gmra.mxu0 %v1868
        %v1984 = vpop.f32.mrf.mxu0
        %v1985 = vadd.f32 0.0, %v1984
        %v1986 = vpop.f32.mrf.mxu0
        %1987 = vmatprep.mubr.f32.mxu0 0.0
        %1988 = vmatmul.mubr.f32.gmra.mxu0 %v1871
        %v1989 = vpop.f32.mrf.mxu0
        %v1990 = vadd.f32 0.0, %v1989
        %v1991 = vpop.f32.mrf.mxu0
        %1992 = vmatprep.mubr.f32.mxu0 0.0
        %1993 = vmatmul.mubr.f32.gmra.mxu0 %v1874
        %v1994 = vpop.f32.mrf.mxu0
        %v1995 = vadd.f32 0.0, %v1994
        %v1996 = vpop.f32.mrf.mxu0
        %1997 = vmatprep.mubr.f32.mxu0 0.0
        %1998 = vmatmul.mubr.f32.gmra.mxu0 %v1877
        %v1999 = vpop.f32.mrf.mxu0
        %v2000 = vadd.f32 0.0, %v1999
        %v2001 = vpop.f32.mrf.mxu0
        %2002 = vmatprep.mubr.f32.mxu0 0.0
        %2003 = vmatmul.mubr.f32.gmra.mxu0 %v1880
        %v2004 = vpop.f32.mrf.mxu0
        %v2005 = vadd.f32 0.0, %v2004
        %v2006 = vpop.f32.mrf.mxu0
        %2007 = vmatprep.mubr.f32.mxu0 0.0
        %2008 = vmatmul.mubr.f32.gmra.mxu0 %v1883
        %v2009 = vpop.f32.mrf.mxu0
        %v2010 = vadd.f32 0.0, %v2009
        %v2011 = vpop.f32.mrf.mxu0
        %2012 = vmatprep.mubr.f32.mxu0 0.0
        %2013 = vmatmul.mubr.f32.gmra.mxu0 %v1886
        %v2014 = vpop.f32.mrf.mxu0
        %v2015 = vadd.f32 0.0, %v2014
        %v2016 = vpop.f32.mrf.mxu0
        %2017 = vmatprep.mubr.f32.mxu0 0.0
        %2018 = vmatmul.mubr.f32.gmra.mxu0 %v1889
        %v2019 = vpop.f32.mrf.mxu0
        %v2020 = vadd.f32 0.0, %v2019
        %v2021 = vpop.f32.mrf.mxu0
        %2022 = vmatprep.mubr.f32.mxu0 0.0
        %2023 = vmatmul.mubr.f32.gmra.mxu0 %v1892
        %v2024 = vpop.f32.mrf.mxu0
        %v2025 = vadd.f32 0.0, %v2024
        %v2026 = vpop.f32.mrf.mxu0
        %2027 = vmatprep.mubr.f32.mxu0 0.0
        %2028 = vmatmul.mubr.f32.gmra.mxu0 %v1895
        %v2029 = vpop.f32.mrf.mxu0
        %v2030 = vadd.f32 0.0, %v2029
        %v2031 = vpop.f32.mrf.mxu0
        %2032 = vmatprep.mubr.f32.mxu0 0.0
        %2033 = vmatmul.mubr.f32.gmra.mxu0 %v1898
        %v2034 = vpop.f32.mrf.mxu0
        %v2035 = vadd.f32 0.0, %v2034
        %v2036 = vpop.f32.mrf.mxu0
        %2037 = vmatprep.mubr.f32.mxu0 0.0
        %2038 = vmatmul.mubr.f32.gmra.mxu0 %v1901
        %v2039 = vpop.f32.mrf.mxu0
        %v2040 = vadd.f32 0.0, %v2039
        %v2041 = vpop.f32.mrf.mxu0
        %2042 = vmatprep.mubr.f32.mxu0 0.0
        %2043 = vmatmul.mubr.f32.gmra.mxu0 %v1904
        %v2044 = vpop.f32.mrf.mxu0
        %v2045 = vadd.f32 0.0, %v2044
        %v2046 = vpop.f32.mrf.mxu0
        %2047 = vmatprep.mubr.f32.mxu0 0.0
        %2048 = vmatmul.mubr.f32.gmra.mxu0 %v1907
        %v2049 = vpop.f32.mrf.mxu0
        %v2050 = vadd.f32 0.0, %v2049
        %v2051 = vpop.f32.mrf.mxu0
        %2052 = vmatprep.mubr.f32.mxu0 0.0
        %2053 = vmatmul.mubr.f32.gmra.mxu0 %v1910
        %v2054 = vpop.f32.mrf.mxu0
        %v2055 = vadd.f32 0.0, %v2054
        %v2056 = vpop.f32.mrf.mxu0
        %2057 = vmatprep.mubr.f32.mxu0 0.0
        %2058 = vmatmul.mubr.f32.gmra.mxu0 %v1913
        %v2059 = vpop.f32.mrf.mxu0
        %v2060 = vadd.f32 0.0, %v2059
        %v2061 = vpop.f32.mrf.mxu0
        %2062 = vdwg.mxu0
        %v2063 = vmul.f32 %v1845, %v1845
        %v2064 = vmul.f32 %v1846, %v1846
        %v2065 = vmul.f32 %v1847, %v1847
        %v2066 = vmul.f32 %v1848, %v1848
        %v2067 = vmul.f32 %v1849, %v1849
        %v2068 = vmul.f32 %v1850, %v1850
        %v2069 = vmul.f32 %v1851, %v1851
        %v2070 = vmul.f32 %v1852, %v1852
        %v2071 = vmul.f32 %v1853, %v1853
        %v2072 = vmul.f32 %v1854, %v1854
        %v2073 = vmul.f32 %v1855, %v1855
        %v2074 = vmul.f32 %v1856, %v1856
        %v2075 = vmul.f32 %v1857, %v1857
        %v2076 = vmul.f32 %v1858, %v1858
        %v2077 = vmul.f32 %v1859, %v1859
        %v2078 = vmul.f32 %v1860, %v1860
        %v2080 = vsel %vm1866, %v2063, 0
        %v2083 = vsel %vm1866, %v2064, 0
        %v2086 = vsel %vm1866, %v2065, 0
        %v2089 = vsel %vm1866, %v2066, 0
        %v2092 = vsel %vm1866, %v2067, 0
        %v2095 = vsel %vm1866, %v2068, 0
        %v2098 = vsel %vm1866, %v2069, 0
        %v2101 = vsel %vm1866, %v2070, 0
        %v2104 = vsel %vm1866, %v2071, 0
        %v2107 = vsel %vm1866, %v2072, 0
        %v2110 = vsel %vm1866, %v2073, 0
        %v2113 = vsel %vm1866, %v2074, 0
        %v2116 = vsel %vm1866, %v2075, 0
        %v2119 = vsel %vm1866, %v2076, 0
        %v2122 = vsel %vm1866, %v2077, 0
        %v2125 = vsel %vm1866, %v2078, 0
        %2127 = vmatprep.subr.mxu0 0.0
        %2128 = vmatpush1.xpose.msra.mxu0 0.0
        %2129 = vmatprep.subr.mxu0 0.0
        %2130 = vmatpush1.xpose.msra.mxu0 0.0
        %2131 = vmatprep.subr.mxu0 0.0
        %2132 = vmatpush1.xpose.msra.mxu0 0.0
        %2133 = vmatprep.subr.mxu0 0.0
        %2134 = vmatpush1.xpose.msra.mxu0 0.0
        %2135 = vmatprep.subr.mxu0 0.0
        %2136 = vmatpush1.xpose.msra.mxu0 0.0
        %2137 = vmatprep.subr.mxu0 0.0
        %2138 = vmatpush1.xpose.msra.mxu0 0.0
        %2139 = vmatprep.subr.mxu0 0.0
        %2140 = vmatpush1.xpose.msra.mxu0 0.0
        %2141 = vmatprep.subr.mxu0 0.0
        %2142 = vmatpush1.xpose.msra.mxu0 0.0
        %2143 = vmatprep.subr.mxu0 0.0
        %2144 = vmatpush1.xpose.msra.mxu0 0.0
        %2145 = vmatprep.subr.mxu0 0.0
        %2146 = vmatpush1.xpose.msra.mxu0 0.0
        %2147 = vmatprep.subr.mxu0 0.0
        %2148 = vmatpush1.xpose.msra.mxu0 0.0
        %2149 = vmatprep.subr.mxu0 0.0
        %2150 = vmatpush1.xpose.msra.mxu0 0.0
        %2151 = vmatprep.subr.mxu0 0.0
        %2152 = vmatpush1.xpose.msra.mxu0 0.0
        %2153 = vmatprep.subr.mxu0 0.0
        %2154 = vmatpush1.xpose.msra.mxu0 0.0
        %2155 = vmatprep.subr.mxu0 0.0
        %2156 = vmatpush1.xpose.msra.mxu0 0.0
        %2157 = vmatprep.subr.mxu0 0.0
        %2158 = vmatpush1.xpose.msra.mxu0 %v1916
        %2159 = vmatprep.subr.mxu0 0.0
        %2160 = vmatpush2.xpose.msra.mxu0 0.0
        %2161 = vmatprep.subr.mxu0 0.0
        %2162 = vmatpush2.xpose.msra.mxu0 0.0
        %2163 = vmatprep.subr.mxu0 0.0
        %2164 = vmatpush2.xpose.msra.mxu0 0.0
        %2165 = vmatprep.subr.mxu0 0.0
        %2166 = vmatpush2.xpose.msra.mxu0 0.0
        %2167 = vmatprep.subr.mxu0 0.0
        %2168 = vmatpush2.xpose.msra.mxu0 0.0
        %2169 = vmatprep.subr.mxu0 0.0
        %2170 = vmatpush2.xpose.msra.mxu0 0.0
        %2171 = vmatprep.subr.mxu0 0.0
        %2172 = vmatpush2.xpose.msra.mxu0 0.0
        %2173 = vmatprep.subr.mxu0 0.0
        %2174 = vmatpush2.xpose.msra.mxu0 0.0
        %2175 = vmatprep.subr.mxu0 0.0
        %2176 = vmatpush2.xpose.msra.mxu0 0.0
        %2177 = vmatprep.subr.mxu0 0.0
        %2178 = vmatpush2.xpose.msra.mxu0 0.0
        %2179 = vmatprep.subr.mxu0 0.0
        %2180 = vmatpush2.xpose.msra.mxu0 0.0
        %2181 = vmatprep.subr.mxu0 0.0
        %2182 = vmatpush2.xpose.msra.mxu0 0.0
        %2183 = vmatprep.subr.mxu0 0.0
        %2184 = vmatpush2.xpose.msra.mxu0 0.0
        %2185 = vmatprep.subr.mxu0 0.0
        %2186 = vmatpush2.xpose.msra.mxu0 0.0
        %2187 = vmatprep.subr.mxu0 0.0
        %2188 = vmatpush2.xpose.msra.mxu0 0.0
        %2189 = vmatprep.subr.mxu0 0.0
        %2190 = vmatpush2.xpose.msra.mxu0 0.0
        %2191 = vmatprep.mubr.f32.mxu0 0.0
        %2192 = vmatmul.mubr.f32.gmra.mxu0 %v2080
        %v2193 = vpop.f32.mrf.mxu0
        %v2194 = vadd.f32 0.0, %v2193
        %v2195 = vpop.f32.mrf.mxu0
        %2196 = vmatprep.mubr.f32.mxu0 0.0
        %2197 = vmatmul.mubr.f32.gmra.mxu0 %v2083
        %v2198 = vpop.f32.mrf.mxu0
        %v2199 = vadd.f32 0.0, %v2198
        %v2200 = vpop.f32.mrf.mxu0
        %2201 = vmatprep.mubr.f32.mxu0 0.0
        %2202 = vmatmul.mubr.f32.gmra.mxu0 %v2086
        %v2203 = vpop.f32.mrf.mxu0
        %v2204 = vadd.f32 0.0, %v2203
        %v2205 = vpop.f32.mrf.mxu0
        %2206 = vmatprep.mubr.f32.mxu0 0.0
        %2207 = vmatmul.mubr.f32.gmra.mxu0 %v2089
        %v2208 = vpop.f32.mrf.mxu0
        %v2209 = vadd.f32 0.0, %v2208
        %v2210 = vpop.f32.mrf.mxu0
        %2211 = vmatprep.mubr.f32.mxu0 0.0
        %2212 = vmatmul.mubr.f32.gmra.mxu0 %v2092
        %v2213 = vpop.f32.mrf.mxu0
        %v2214 = vadd.f32 0.0, %v2213
        %v2215 = vpop.f32.mrf.mxu0
        %2216 = vmatprep.mubr.f32.mxu0 0.0
        %2217 = vmatmul.mubr.f32.gmra.mxu0 %v2095
        %v2218 = vpop.f32.mrf.mxu0
        %v2219 = vadd.f32 0.0, %v2218
        %v2220 = vpop.f32.mrf.mxu0
        %2221 = vmatprep.mubr.f32.mxu0 0.0
        %2222 = vmatmul.mubr.f32.gmra.mxu0 %v2098
        %v2223 = vpop.f32.mrf.mxu0
        %v2224 = vadd.f32 0.0, %v2223
        %v2225 = vpop.f32.mrf.mxu0
        %2226 = vmatprep.mubr.f32.mxu0 0.0
        %2227 = vmatmul.mubr.f32.gmra.mxu0 %v2101
        %v2228 = vpop.f32.mrf.mxu0
        %v2229 = vadd.f32 0.0, %v2228
        %v2230 = vpop.f32.mrf.mxu0
        %2231 = vmatprep.mubr.f32.mxu0 0.0
        %2232 = vmatmul.mubr.f32.gmra.mxu0 %v2104
        %v2233 = vpop.f32.mrf.mxu0
        %v2234 = vadd.f32 0.0, %v2233
        %v2235 = vpop.f32.mrf.mxu0
        %2236 = vmatprep.mubr.f32.mxu0 0.0
        %2237 = vmatmul.mubr.f32.gmra.mxu0 %v2107
        %v2238 = vpop.f32.mrf.mxu0
        %v2239 = vadd.f32 0.0, %v2238
        %v2240 = vpop.f32.mrf.mxu0
        %2241 = vmatprep.mubr.f32.mxu0 0.0
        %2242 = vmatmul.mubr.f32.gmra.mxu0 %v2110
        %v2243 = vpop.f32.mrf.mxu0
        %v2244 = vadd.f32 0.0, %v2243
        %v2245 = vpop.f32.mrf.mxu0
        %2246 = vmatprep.mubr.f32.mxu0 0.0
        %2247 = vmatmul.mubr.f32.gmra.mxu0 %v2113
        %v2248 = vpop.f32.mrf.mxu0
        %v2249 = vadd.f32 0.0, %v2248
        %v2250 = vpop.f32.mrf.mxu0
        %2251 = vmatprep.mubr.f32.mxu0 0.0
        %2252 = vmatmul.mubr.f32.gmra.mxu0 %v2116
        %v2253 = vpop.f32.mrf.mxu0
        %v2254 = vadd.f32 0.0, %v2253
        %v2255 = vpop.f32.mrf.mxu0
        %2256 = vmatprep.mubr.f32.mxu0 0.0
        %2257 = vmatmul.mubr.f32.gmra.mxu0 %v2119
        %v2258 = vpop.f32.mrf.mxu0
        %v2259 = vadd.f32 0.0, %v2258
        %v2260 = vpop.f32.mrf.mxu0
        %2261 = vmatprep.mubr.f32.mxu0 0.0
        %2262 = vmatmul.mubr.f32.gmra.mxu0 %v2122
        %v2263 = vpop.f32.mrf.mxu0
        %v2264 = vadd.f32 0.0, %v2263
        %v2265 = vpop.f32.mrf.mxu0
        %2266 = vmatprep.mubr.f32.mxu0 0.0
        %2267 = vmatmul.mubr.f32.gmra.mxu0 %v2125
        %v2268 = vpop.f32.mrf.mxu0
        %v2269 = vadd.f32 0.0, %v2268
        %v2270 = vpop.f32.mrf.mxu0
        %2271 = vdwg.mxu0
        %v2272 = vmul.f32 %v1985, 0.03125
        %v2273 = vmul.f32 %v1990, 0.03125
        %v2274 = vmul.f32 %v1995, 0.03125
        %v2275 = vmul.f32 %v2000, 0.03125
        %v2276 = vmul.f32 %v2005, 0.03125
        %v2277 = vmul.f32 %v2010, 0.03125
        %v2278 = vmul.f32 %v2015, 0.03125
        %v2279 = vmul.f32 %v2020, 0.03125
        %v2280 = vmul.f32 %v2025, 0.03125
        %v2281 = vmul.f32 %v2030, 0.03125
        %v2282 = vmul.f32 %v2035, 0.03125
        %v2283 = vmul.f32 %v2040, 0.03125
        %v2284 = vmul.f32 %v2045, 0.03125
        %v2285 = vmul.f32 %v2050, 0.03125
        %v2286 = vmul.f32 %v2055, 0.03125
        %v2287 = vmul.f32 %v2060, 0.03125
        %v2288 = vmul.f32 %v2194, 0.03125
        %v2289 = vmul.f32 %v2199, 0.03125
        %v2290 = vmul.f32 %v2204, 0.03125
        %v2291 = vmul.f32 %v2209, 0.03125
        %v2292 = vmul.f32 %v2214, 0.03125
        %v2293 = vmul.f32 %v2219, 0.03125
        %v2294 = vmul.f32 %v2224, 0.03125
        %v2295 = vmul.f32 %v2229, 0.03125
        %v2296 = vmul.f32 %v2234, 0.03125
        %v2297 = vmul.f32 %v2239, 0.03125
        %v2298 = vmul.f32 %v2244, 0.03125
        %v2299 = vmul.f32 %v2249, 0.03125
        %v2300 = vmul.f32 %v2254, 0.03125
        %v2301 = vmul.f32 %v2259, 0.03125
        %v2302 = vmul.f32 %v2264, 0.03125
        %v2303 = vmul.f32 %v2269, 0.03125
        %v2304 = vmul.f32 %v2272, %v2272
        %v2305 = vmul.f32 %v2273, %v2273
        %v2306 = vmul.f32 %v2274, %v2274
        %v2307 = vmul.f32 %v2275, %v2275
        %v2308 = vmul.f32 %v2276, %v2276
        %v2309 = vmul.f32 %v2277, %v2277
        %v2310 = vmul.f32 %v2278, %v2278
        %v2311 = vmul.f32 %v2279, %v2279
        %v2312 = vmul.f32 %v2280, %v2280
        %v2313 = vmul.f32 %v2281, %v2281
        %v2314 = vmul.f32 %v2282, %v2282
        %v2315 = vmul.f32 %v2283, %v2283
        %v2316 = vmul.f32 %v2284, %v2284
        %v2317 = vmul.f32 %v2285, %v2285
        %v2318 = vmul.f32 %v2286, %v2286
        %v2319 = vmul.f32 %v2287, %v2287
        %v2320 = vsub.f32 %v2288, %v2304
        %v2321 = vsub.f32 %v2289, %v2305
        %v2322 = vsub.f32 %v2290, %v2306
        %v2323 = vsub.f32 %v2291, %v2307
        %v2324 = vsub.f32 %v2292, %v2308
        %v2325 = vsub.f32 %v2293, %v2309
        %v2326 = vsub.f32 %v2294, %v2310
        %v2327 = vsub.f32 %v2295, %v2311
        %v2328 = vsub.f32 %v2296, %v2312
        %v2329 = vsub.f32 %v2297, %v2313
        %v2330 = vsub.f32 %v2298, %v2314
        %v2331 = vsub.f32 %v2299, %v2315
        %v2332 = vsub.f32 %v2300, %v2316
        %v2333 = vsub.f32 %v2301, %v2317
        %v2334 = vsub.f32 %v2302, %v2318
        %v2335 = vsub.f32 %v2303, %v2319
        %v2336 = vmax.f32 %v2320, 0.0
        %v2337 = vmax.f32 %v2321, 0.0
        %v2338 = vmax.f32 %v2322, 0.0
        %v2339 = vmax.f32 %v2323, 0.0
        %v2340 = vmax.f32 %v2324, 0.0
        %v2341 = vmax.f32 %v2325, 0.0
        %v2342 = vmax.f32 %v2326, 0.0
        %v2343 = vmax.f32 %v2327, 0.0
        %v2344 = vmax.f32 %v2328, 0.0
        %v2345 = vmax.f32 %v2329, 0.0
        %v2346 = vmax.f32 %v2330, 0.0
        %v2347 = vmax.f32 %v2331, 0.0
        %v2348 = vmax.f32 %v2332, 0.0
        %v2349 = vmax.f32 %v2333, 0.0
        %v2350 = vmax.f32 %v2334, 0.0
        %v2351 = vmax.f32 %v2335, 0.0
        %v2352 = vadd.f32 %v2336, 1e-05
        %v2353 = vadd.f32 %v2337, 1e-05
        %v2354 = vadd.f32 %v2338, 1e-05
        %v2355 = vadd.f32 %v2339, 1e-05
        %v2356 = vadd.f32 %v2340, 1e-05
        %v2357 = vadd.f32 %v2341, 1e-05
        %v2358 = vadd.f32 %v2342, 1e-05
        %v2359 = vadd.f32 %v2343, 1e-05
        %v2360 = vadd.f32 %v2344, 1e-05
        %v2361 = vadd.f32 %v2345, 1e-05
        %v2362 = vadd.f32 %v2346, 1e-05
        %v2363 = vadd.f32 %v2347, 1e-05
        %v2364 = vadd.f32 %v2348, 1e-05
        %v2365 = vadd.f32 %v2349, 1e-05
        %v2366 = vadd.f32 %v2350, 1e-05
        %v2367 = vadd.f32 %v2351, 1e-05
        %v2368 = vrsqrt.pop %v2352
        %v2369 = vrsqrt.pop %v2353
        %v2370 = vrsqrt.pop %v2354
        %v2371 = vrsqrt.pop %v2355
        %v2372 = vrsqrt.pop %v2356
        %v2373 = vrsqrt.pop %v2357
        %v2374 = vrsqrt.pop %v2358
        %v2375 = vrsqrt.pop %v2359
        %v2376 = vrsqrt.pop %v2360
        %v2377 = vrsqrt.pop %v2361
        %v2378 = vrsqrt.pop %v2362
        %v2379 = vrsqrt.pop %v2363
        %v2380 = vrsqrt.pop %v2364
        %v2381 = vrsqrt.pop %v2365
        %v2382 = vrsqrt.pop %v2366
        %v2383 = vrsqrt.pop %v2367
        %v2385 = vsel %vm1201, %v2272, 0
        %v2388 = vsel %vm1201, %v2273, 0
        %v2391 = vsel %vm1201, %v2274, 0
        %v2394 = vsel %vm1201, %v2275, 0
        %v2397 = vsel %vm1201, %v2276, 0
        %v2400 = vsel %vm1201, %v2277, 0
        %v2403 = vsel %vm1201, %v2278, 0
        %v2406 = vsel %vm1201, %v2279, 0
        %v2409 = vsel %vm1201, %v2280, 0
        %v2412 = vsel %vm1201, %v2281, 0
        %v2415 = vsel %vm1201, %v2282, 0
        %v2418 = vsel %vm1201, %v2283, 0
        %v2421 = vsel %vm1201, %v2284, 0
        %v2424 = vsel %vm1201, %v2285, 0
        %v2427 = vsel %vm1201, %v2286, 0
        %v2430 = vsel %vm1201, %v2287, 0
        %v2432 = vsel %vm1250, %v1865, 0
        %2434 = vmatprep.subr.mxu0 0.0
        %2435 = vmatpush1.msra.mxu0 0.0
        %2436 = vmatprep.subr.mxu0 0.0
        %2437 = vmatpush1.msra.mxu0 0.0
        %2438 = vmatprep.subr.mxu0 0.0
        %2439 = vmatpush1.msra.mxu0 0.0
        %2440 = vmatprep.subr.mxu0 0.0
        %2441 = vmatpush1.msra.mxu0 0.0
        %2442 = vmatprep.subr.mxu0 0.0
        %2443 = vmatpush1.msra.mxu0 0.0
        %2444 = vmatprep.subr.mxu0 0.0
        %2445 = vmatpush1.msra.mxu0 0.0
        %2446 = vmatprep.subr.mxu0 0.0
        %2447 = vmatpush1.msra.mxu0 0.0
        %2448 = vmatprep.subr.mxu0 0.0
        %2449 = vmatpush1.msra.mxu0 0.0
        %2450 = vmatprep.subr.mxu0 0.0
        %2451 = vmatpush1.msra.mxu0 0.0
        %2452 = vmatprep.subr.mxu0 0.0
        %2453 = vmatpush1.msra.mxu0 0.0
        %2454 = vmatprep.subr.mxu0 0.0
        %2455 = vmatpush1.msra.mxu0 0.0
        %2456 = vmatprep.subr.mxu0 0.0
        %2457 = vmatpush1.msra.mxu0 0.0
        %2458 = vmatprep.subr.mxu0 0.0
        %2459 = vmatpush1.msra.mxu0 0.0
        %2460 = vmatprep.subr.mxu0 0.0
        %2461 = vmatpush1.msra.mxu0 0.0
        %2462 = vmatprep.subr.mxu0 0.0
        %2463 = vmatpush1.msra.mxu0 0.0
        %2464 = vmatprep.subr.mxu0 0.0
        %2465 = vmatpush1.msra.mxu0 %v2432
        %2466 = vmatprep.subr.mxu0 0.0
        %2467 = vmatpush2.msra.mxu0 0.0
        %2468 = vmatprep.subr.mxu0 0.0
        %2469 = vmatpush2.msra.mxu0 0.0
        %2470 = vmatprep.subr.mxu0 0.0
        %2471 = vmatpush2.msra.mxu0 0.0
        %2472 = vmatprep.subr.mxu0 0.0
        %2473 = vmatpush2.msra.mxu0 0.0
        %2474 = vmatprep.subr.mxu0 0.0
        %2475 = vmatpush2.msra.mxu0 0.0
        %2476 = vmatprep.subr.mxu0 0.0
        %2477 = vmatpush2.msra.mxu0 0.0
        %2478 = vmatprep.subr.mxu0 0.0
        %2479 = vmatpush2.msra.mxu0 0.0
        %2480 = vmatprep.subr.mxu0 0.0
        %2481 = vmatpush2.msra.mxu0 0.0
        %2482 = vmatprep.subr.mxu0 0.0
        %2483 = vmatpush2.msra.mxu0 0.0
        %2484 = vmatprep.subr.mxu0 0.0
        %2485 = vmatpush2.msra.mxu0 0.0
        %2486 = vmatprep.subr.mxu0 0.0
        %2487 = vmatpush2.msra.mxu0 0.0
        %2488 = vmatprep.subr.mxu0 0.0
        %2489 = vmatpush2.msra.mxu0 0.0
        %2490 = vmatprep.subr.mxu0 0.0
        %2491 = vmatpush2.msra.mxu0 0.0
        %2492 = vmatprep.subr.mxu0 0.0
        %2493 = vmatpush2.msra.mxu0 0.0
        %2494 = vmatprep.subr.mxu0 0.0
        %2495 = vmatpush2.msra.mxu0 0.0
        %2496 = vmatprep.subr.mxu0 0.0
        %2497 = vmatpush2.msra.mxu0 0.0
        %2498 = vmatprep.mubr.f32.mxu0 0.0
        %2499 = vmatmul.mubr.f32.gmra.mxu0 %v2385
        %v2500 = vpop.f32.mrf.mxu0
        %v2501 = vadd.f32 0.0, %v2500
        %v2502 = vpop.f32.mrf.mxu0
        %2503 = vmatprep.mubr.f32.mxu0 0.0
        %2504 = vmatmul.mubr.f32.gmra.mxu0 %v2388
        %v2505 = vpop.f32.mrf.mxu0
        %v2506 = vadd.f32 0.0, %v2505
        %v2507 = vpop.f32.mrf.mxu0
        %2508 = vmatprep.mubr.f32.mxu0 0.0
        %2509 = vmatmul.mubr.f32.gmra.mxu0 %v2391
        %v2510 = vpop.f32.mrf.mxu0
        %v2511 = vadd.f32 0.0, %v2510
        %v2512 = vpop.f32.mrf.mxu0
        %2513 = vmatprep.mubr.f32.mxu0 0.0
        %2514 = vmatmul.mubr.f32.gmra.mxu0 %v2394
        %v2515 = vpop.f32.mrf.mxu0
        %v2516 = vadd.f32 0.0, %v2515
        %v2517 = vpop.f32.mrf.mxu0
        %2518 = vmatprep.mubr.f32.mxu0 0.0
        %2519 = vmatmul.mubr.f32.gmra.mxu0 %v2397
        %v2520 = vpop.f32.mrf.mxu0
        %v2521 = vadd.f32 0.0, %v2520
        %v2522 = vpop.f32.mrf.mxu0
        %2523 = vmatprep.mubr.f32.mxu0 0.0
        %2524 = vmatmul.mubr.f32.gmra.mxu0 %v2400
        %v2525 = vpop.f32.mrf.mxu0
        %v2526 = vadd.f32 0.0, %v2525
        %v2527 = vpop.f32.mrf.mxu0
        %2528 = vmatprep.mubr.f32.mxu0 0.0
        %2529 = vmatmul.mubr.f32.gmra.mxu0 %v2403
        %v2530 = vpop.f32.mrf.mxu0
        %v2531 = vadd.f32 0.0, %v2530
        %v2532 = vpop.f32.mrf.mxu0
        %2533 = vmatprep.mubr.f32.mxu0 0.0
        %2534 = vmatmul.mubr.f32.gmra.mxu0 %v2406
        %v2535 = vpop.f32.mrf.mxu0
        %v2536 = vadd.f32 0.0, %v2535
        %v2537 = vpop.f32.mrf.mxu0
        %2538 = vmatprep.mubr.f32.mxu0 0.0
        %2539 = vmatmul.mubr.f32.gmra.mxu0 %v2409
        %v2540 = vpop.f32.mrf.mxu0
        %v2541 = vadd.f32 0.0, %v2540
        %v2542 = vpop.f32.mrf.mxu0
        %2543 = vmatprep.mubr.f32.mxu0 0.0
        %2544 = vmatmul.mubr.f32.gmra.mxu0 %v2412
        %v2545 = vpop.f32.mrf.mxu0
        %v2546 = vadd.f32 0.0, %v2545
        %v2547 = vpop.f32.mrf.mxu0
        %2548 = vmatprep.mubr.f32.mxu0 0.0
        %2549 = vmatmul.mubr.f32.gmra.mxu0 %v2415
        %v2550 = vpop.f32.mrf.mxu0
        %v2551 = vadd.f32 0.0, %v2550
        %v2552 = vpop.f32.mrf.mxu0
        %2553 = vmatprep.mubr.f32.mxu0 0.0
        %2554 = vmatmul.mubr.f32.gmra.mxu0 %v2418
        %v2555 = vpop.f32.mrf.mxu0
        %v2556 = vadd.f32 0.0, %v2555
        %v2557 = vpop.f32.mrf.mxu0
        %2558 = vmatprep.mubr.f32.mxu0 0.0
        %2559 = vmatmul.mubr.f32.gmra.mxu0 %v2421
        %v2560 = vpop.f32.mrf.mxu0
        %v2561 = vadd.f32 0.0, %v2560
        %v2562 = vpop.f32.mrf.mxu0
        %2563 = vmatprep.mubr.f32.mxu0 0.0
        %2564 = vmatmul.mubr.f32.gmra.mxu0 %v2424
        %v2565 = vpop.f32.mrf.mxu0
        %v2566 = vadd.f32 0.0, %v2565
        %v2567 = vpop.f32.mrf.mxu0
        %2568 = vmatprep.mubr.f32.mxu0 0.0
        %2569 = vmatmul.mubr.f32.gmra.mxu0 %v2427
        %v2570 = vpop.f32.mrf.mxu0
        %v2571 = vadd.f32 0.0, %v2570
        %v2572 = vpop.f32.mrf.mxu0
        %2573 = vmatprep.mubr.f32.mxu0 0.0
        %2574 = vmatmul.mubr.f32.gmra.mxu0 %v2430
        %v2575 = vpop.f32.mrf.mxu0
        %v2576 = vadd.f32 0.0, %v2575
        %v2577 = vpop.f32.mrf.mxu0
        %2578 = vdwg.mxu0
        %v2580 = vsel %vm1201, %v2368, 0
        %v2583 = vsel %vm1201, %v2369, 0
        %v2586 = vsel %vm1201, %v2370, 0
        %v2589 = vsel %vm1201, %v2371, 0
        %v2592 = vsel %vm1201, %v2372, 0
        %v2595 = vsel %vm1201, %v2373, 0
        %v2598 = vsel %vm1201, %v2374, 0
        %v2601 = vsel %vm1201, %v2375, 0
        %v2604 = vsel %vm1201, %v2376, 0
        %v2607 = vsel %vm1201, %v2377, 0
        %v2610 = vsel %vm1201, %v2378, 0
        %v2613 = vsel %vm1201, %v2379, 0
        %v2616 = vsel %vm1201, %v2380, 0
        %v2619 = vsel %vm1201, %v2381, 0
        %v2622 = vsel %vm1201, %v2382, 0
        %v2625 = vsel %vm1201, %v2383, 0
        %2627 = vmatprep.subr.mxu0 0.0
        %2628 = vmatpush1.msra.mxu0 0.0
        %2629 = vmatprep.subr.mxu0 0.0
        %2630 = vmatpush1.msra.mxu0 0.0
        %2631 = vmatprep.subr.mxu0 0.0
        %2632 = vmatpush1.msra.mxu0 0.0
        %2633 = vmatprep.subr.mxu0 0.0
        %2634 = vmatpush1.msra.mxu0 0.0
        %2635 = vmatprep.subr.mxu0 0.0
        %2636 = vmatpush1.msra.mxu0 0.0
        %2637 = vmatprep.subr.mxu0 0.0
        %2638 = vmatpush1.msra.mxu0 0.0
        %2639 = vmatprep.subr.mxu0 0.0
        %2640 = vmatpush1.msra.mxu0 0.0
        %2641 = vmatprep.subr.mxu0 0.0
        %2642 = vmatpush1.msra.mxu0 0.0
        %2643 = vmatprep.subr.mxu0 0.0
        %2644 = vmatpush1.msra.mxu0 0.0
        %2645 = vmatprep.subr.mxu0 0.0
        %2646 = vmatpush1.msra.mxu0 0.0
        %2647 = vmatprep.subr.mxu0 0.0
        %2648 = vmatpush1.msra.mxu0 0.0
        %2649 = vmatprep.subr.mxu0 0.0
        %2650 = vmatpush1.msra.mxu0 0.0
        %2651 = vmatprep.subr.mxu0 0.0
        %2652 = vmatpush1.msra.mxu0 0.0
        %2653 = vmatprep.subr.mxu0 0.0
        %2654 = vmatpush1.msra.mxu0 0.0
        %2655 = vmatprep.subr.mxu0 0.0
        %2656 = vmatpush1.msra.mxu0 0.0
        %2657 = vmatprep.subr.mxu0 0.0
        %2658 = vmatpush1.msra.mxu0 %v2432
        %2659 = vmatprep.subr.mxu0 0.0
        %2660 = vmatpush2.msra.mxu0 0.0
        %2661 = vmatprep.subr.mxu0 0.0
        %2662 = vmatpush2.msra.mxu0 0.0
        %2663 = vmatprep.subr.mxu0 0.0
        %2664 = vmatpush2.msra.mxu0 0.0
        %2665 = vmatprep.subr.mxu0 0.0
        %2666 = vmatpush2.msra.mxu0 0.0
        %2667 = vmatprep.subr.mxu0 0.0
        %2668 = vmatpush2.msra.mxu0 0.0
        %2669 = vmatprep.subr.mxu0 0.0
        %2670 = vmatpush2.msra.mxu0 0.0
        %2671 = vmatprep.subr.mxu0 0.0
        %2672 = vmatpush2.msra.mxu0 0.0
        %2673 = vmatprep.subr.mxu0 0.0
        %2674 = vmatpush2.msra.mxu0 0.0
        %2675 = vmatprep.subr.mxu0 0.0
        %2676 = vmatpush2.msra.mxu0 0.0
        %2677 = vmatprep.subr.mxu0 0.0
        %2678 = vmatpush2.msra.mxu0 0.0
        %2679 = vmatprep.subr.mxu0 0.0
        %2680 = vmatpush2.msra.mxu0 0.0
        %2681 = vmatprep.subr.mxu0 0.0
        %2682 = vmatpush2.msra.mxu0 0.0
        %2683 = vmatprep.subr.mxu0 0.0
        %2684 = vmatpush2.msra.mxu0 0.0
        %2685 = vmatprep.subr.mxu0 0.0
        %2686 = vmatpush2.msra.mxu0 0.0
        %2687 = vmatprep.subr.mxu0 0.0
        %2688 = vmatpush2.msra.mxu0 0.0
        %2689 = vmatprep.subr.mxu0 0.0
        %2690 = vmatpush2.msra.mxu0 0.0
        %2691 = vmatprep.mubr.f32.mxu0 0.0
        %2692 = vmatmul.mubr.f32.gmra.mxu0 %v2580
        %v2693 = vpop.f32.mrf.mxu0
        %v2694 = vadd.f32 0.0, %v2693
        %v2695 = vpop.f32.mrf.mxu0
        %2696 = vmatprep.mubr.f32.mxu0 0.0
        %2697 = vmatmul.mubr.f32.gmra.mxu0 %v2583
        %v2698 = vpop.f32.mrf.mxu0
        %v2699 = vadd.f32 0.0, %v2698
        %v2700 = vpop.f32.mrf.mxu0
        %2701 = vmatprep.mubr.f32.mxu0 0.0
        %2702 = vmatmul.mubr.f32.gmra.mxu0 %v2586
        %v2703 = vpop.f32.mrf.mxu0
        %v2704 = vadd.f32 0.0, %v2703
        %v2705 = vpop.f32.mrf.mxu0
        %2706 = vmatprep.mubr.f32.mxu0 0.0
        %2707 = vmatmul.mubr.f32.gmra.mxu0 %v2589
        %v2708 = vpop.f32.mrf.mxu0
        %v2709 = vadd.f32 0.0, %v2708
        %v2710 = vpop.f32.mrf.mxu0
        %2711 = vmatprep.mubr.f32.mxu0 0.0
        %2712 = vmatmul.mubr.f32.gmra.mxu0 %v2592
        %v2713 = vpop.f32.mrf.mxu0
        %v2714 = vadd.f32 0.0, %v2713
        %v2715 = vpop.f32.mrf.mxu0
        %2716 = vmatprep.mubr.f32.mxu0 0.0
        %2717 = vmatmul.mubr.f32.gmra.mxu0 %v2595
        %v2718 = vpop.f32.mrf.mxu0
        %v2719 = vadd.f32 0.0, %v2718
        %v2720 = vpop.f32.mrf.mxu0
        %2721 = vmatprep.mubr.f32.mxu0 0.0
        %2722 = vmatmul.mubr.f32.gmra.mxu0 %v2598
        %v2723 = vpop.f32.mrf.mxu0
        %v2724 = vadd.f32 0.0, %v2723
        %v2725 = vpop.f32.mrf.mxu0
        %2726 = vmatprep.mubr.f32.mxu0 0.0
        %2727 = vmatmul.mubr.f32.gmra.mxu0 %v2601
        %v2728 = vpop.f32.mrf.mxu0
        %v2729 = vadd.f32 0.0, %v2728
        %v2730 = vpop.f32.mrf.mxu0
        %2731 = vmatprep.mubr.f32.mxu0 0.0
        %2732 = vmatmul.mubr.f32.gmra.mxu0 %v2604
        %v2733 = vpop.f32.mrf.mxu0
        %v2734 = vadd.f32 0.0, %v2733
        %v2735 = vpop.f32.mrf.mxu0
        %2736 = vmatprep.mubr.f32.mxu0 0.0
        %2737 = vmatmul.mubr.f32.gmra.mxu0 %v2607
        %v2738 = vpop.f32.mrf.mxu0
        %v2739 = vadd.f32 0.0, %v2738
        %v2740 = vpop.f32.mrf.mxu0
        %2741 = vmatprep.mubr.f32.mxu0 0.0
        %2742 = vmatmul.mubr.f32.gmra.mxu0 %v2610
        %v2743 = vpop.f32.mrf.mxu0
        %v2744 = vadd.f32 0.0, %v2743
        %v2745 = vpop.f32.mrf.mxu0
        %2746 = vmatprep.mubr.f32.mxu0 0.0
        %2747 = vmatmul.mubr.f32.gmra.mxu0 %v2613
        %v2748 = vpop.f32.mrf.mxu0
        %v2749 = vadd.f32 0.0, %v2748
        %v2750 = vpop.f32.mrf.mxu0
        %2751 = vmatprep.mubr.f32.mxu0 0.0
        %2752 = vmatmul.mubr.f32.gmra.mxu0 %v2616
        %v2753 = vpop.f32.mrf.mxu0
        %v2754 = vadd.f32 0.0, %v2753
        %v2755 = vpop.f32.mrf.mxu0
        %2756 = vmatprep.mubr.f32.mxu0 0.0
        %2757 = vmatmul.mubr.f32.gmra.mxu0 %v2619
        %v2758 = vpop.f32.mrf.mxu0
        %v2759 = vadd.f32 0.0, %v2758
        %v2760 = vpop.f32.mrf.mxu0
        %2761 = vmatprep.mubr.f32.mxu0 0.0
        %2762 = vmatmul.mubr.f32.gmra.mxu0 %v2622
        %v2763 = vpop.f32.mrf.mxu0
        %v2764 = vadd.f32 0.0, %v2763
        %v2765 = vpop.f32.mrf.mxu0
        %2766 = vmatprep.mubr.f32.mxu0 0.0
        %2767 = vmatmul.mubr.f32.gmra.mxu0 %v2625
        %v2768 = vpop.f32.mrf.mxu0
        %v2769 = vadd.f32 0.0, %v2768
        %v2770 = vpop.f32.mrf.mxu0
        %2771 = vdwg.mxu0
        %v2772 = vsub.f32 %v1845, %v2501
        %v2773 = vsub.f32 %v1846, %v2506
        %v2774 = vsub.f32 %v1847, %v2511
        %v2775 = vsub.f32 %v1848, %v2516
        %v2776 = vsub.f32 %v1849, %v2521
        %v2777 = vsub.f32 %v1850, %v2526
        %v2778 = vsub.f32 %v1851, %v2531
        %v2779 = vsub.f32 %v1852, %v2536
        %v2780 = vsub.f32 %v1853, %v2541
        %v2781 = vsub.f32 %v1854, %v2546
        %v2782 = vsub.f32 %v1855, %v2551
        %v2783 = vsub.f32 %v1856, %v2556
        %v2784 = vsub.f32 %v1857, %v2561
        %v2785 = vsub.f32 %v1858, %v2566
        %v2786 = vsub.f32 %v1859, %v2571
        %v2787 = vsub.f32 %v1860, %v2576
        %v2788 = vmul.f32 %v2772, %v2694
        %v2789 = vmul.f32 %v2773, %v2699
        %v2790 = vmul.f32 %v2774, %v2704
        %v2791 = vmul.f32 %v2775, %v2709
        %v2792 = vmul.f32 %v2776, %v2714
        %v2793 = vmul.f32 %v2777, %v2719
        %v2794 = vmul.f32 %v2778, %v2724
        %v2795 = vmul.f32 %v2779, %v2729
        %v2796 = vmul.f32 %v2780, %v2734
        %v2797 = vmul.f32 %v2781, %v2739
        %v2798 = vmul.f32 %v2782, %v2744
        %v2799 = vmul.f32 %v2783, %v2749
        %v2800 = vmul.f32 %v2784, %v2754
        %v2801 = vmul.f32 %v2785, %v2759
        %v2802 = vmul.f32 %v2786, %v2764
        %v2803 = vmul.f32 %v2787, %v2769
        %v2804 = vlaneseq
        %v2805 = vshrl.u32 %v2804, 7
        %v2806 = vsub.s32 0, %v2805
        %v2807 = vrot.slane %v305, %v2806
        %v2808 = vmul.f32 %v2788, %v2807
        %v2809 = vmul.f32 %v2789, %v2807
        %v2810 = vmul.f32 %v2790, %v2807
        %v2811 = vmul.f32 %v2791, %v2807
        %v2812 = vmul.f32 %v2792, %v2807
        %v2813 = vmul.f32 %v2793, %v2807
        %v2814 = vmul.f32 %v2794, %v2807
        %v2815 = vmul.f32 %v2795, %v2807
        %v2816 = vmul.f32 %v2796, %v2807
        %v2817 = vmul.f32 %v2797, %v2807
        %v2818 = vmul.f32 %v2798, %v2807
        %v2819 = vmul.f32 %v2799, %v2807
        %v2820 = vmul.f32 %v2800, %v2807
        %v2821 = vmul.f32 %v2801, %v2807
        %v2822 = vmul.f32 %v2802, %v2807
        %v2823 = vmul.f32 %v2803, %v2807
        %v2824 = vlaneseq
        %v2825 = vshrl.u32 %v2824, 7
        %v2826 = vsub.s32 0, %v2825
        %v2827 = vrot.slane %v306, %v2826
        %v2828 = vadd.f32 %v2808, %v2827
        %v2829 = vadd.f32 %v2809, %v2827
        %v2830 = vadd.f32 %v2810, %v2827
        %v2831 = vadd.f32 %v2811, %v2827
        %v2832 = vadd.f32 %v2812, %v2827
        %v2833 = vadd.f32 %v2813, %v2827
        %v2834 = vadd.f32 %v2814, %v2827
        %v2835 = vadd.f32 %v2815, %v2827
        %v2836 = vadd.f32 %v2816, %v2827
        %v2837 = vadd.f32 %v2817, %v2827
        %v2838 = vadd.f32 %v2818, %v2827
        %v2839 = vadd.f32 %v2819, %v2827
        %v2840 = vadd.f32 %v2820, %v2827
        %v2841 = vadd.f32 %v2821, %v2827
        %v2842 = vadd.f32 %v2822, %v2827
        %v2843 = vadd.f32 %v2823, %v2827
        %v2844 = vmax.f32 %v2828, 0.0
        %v2845 = vmax.f32 %v2829, 0.0
        %v2846 = vmax.f32 %v2830, 0.0
        %v2847 = vmax.f32 %v2831, 0.0
        %v2848 = vmax.f32 %v2832, 0.0
        %v2849 = vmax.f32 %v2833, 0.0
        %v2850 = vmax.f32 %v2834, 0.0
        %v2851 = vmax.f32 %v2835, 0.0
        %v2852 = vmax.f32 %v2836, 0.0
        %v2853 = vmax.f32 %v2837, 0.0
        %v2854 = vmax.f32 %v2838, 0.0
        %v2855 = vmax.f32 %v2839, 0.0
        %v2856 = vmax.f32 %v2840, 0.0
        %v2857 = vmax.f32 %v2841, 0.0
        %v2858 = vmax.f32 %v2842, 0.0
        %v2859 = vmax.f32 %v2843, 0.0
        %v2860 = vld [vmem:[%s5] sm:$0x3]
        %2862 = vset.pattern.permute.xlu0 0
        %2863 = vperm.xlu0 %2862, %v307
        %v2864 = vpop.permute.xlu0 %2863
        %v2867 = vsel %vm1866, %v2860, 0
        %v2870 = vsel %vm1866, %v2844, 0
        %v2873 = vsel %vm1866, %v2845, 0
        %v2876 = vsel %vm1866, %v2846, 0
        %v2879 = vsel %vm1866, %v2847, 0
        %v2882 = vsel %vm1866, %v2848, 0
        %v2885 = vsel %vm1866, %v2849, 0
        %v2888 = vsel %vm1866, %v2850, 0
        %v2891 = vsel %vm1866, %v2851, 0
        %v2894 = vsel %vm1866, %v2852, 0
        %v2897 = vsel %vm1866, %v2853, 0
        %v2900 = vsel %vm1866, %v2854, 0
        %v2903 = vsel %vm1866, %v2855, 0
        %v2906 = vsel %vm1866, %v2856, 0
        %v2909 = vsel %vm1866, %v2857, 0
        %v2912 = vsel %vm1866, %v2858, 0
        %v2915 = vsel %vm1866, %v2859, 0
        %2917 = vmatprep.subr.mxu0 0.0
        %2918 = vmatpush1.xpose.msra.mxu0 %v2915
        %2919 = vmatprep.subr.mxu0 0.0
        %2920 = vmatpush1.xpose.msra.mxu0 %v2912
        %2921 = vmatprep.subr.mxu0 0.0
        %2922 = vmatpush1.xpose.msra.mxu0 %v2909
        %2923 = vmatprep.subr.mxu0 0.0
        %2924 = vmatpush1.xpose.msra.mxu0 %v2906
        %2925 = vmatprep.subr.mxu0 0.0
        %2926 = vmatpush1.xpose.msra.mxu0 %v2903
        %2927 = vmatprep.subr.mxu0 0.0
        %2928 = vmatpush1.xpose.msra.mxu0 %v2900
        %2929 = vmatprep.subr.mxu0 0.0
        %2930 = vmatpush1.xpose.msra.mxu0 %v2897
        %2931 = vmatprep.subr.mxu0 0.0
        %2932 = vmatpush1.xpose.msra.mxu0 %v2894
        %2933 = vmatprep.subr.mxu0 0.0
        %2934 = vmatpush1.xpose.msra.mxu0 %v2891
        %2935 = vmatprep.subr.mxu0 0.0
        %2936 = vmatpush1.xpose.msra.mxu0 %v2888
        %2937 = vmatprep.subr.mxu0 0.0
        %2938 = vmatpush1.xpose.msra.mxu0 %v2885
        %2939 = vmatprep.subr.mxu0 0.0
        %2940 = vmatpush1.xpose.msra.mxu0 %v2882
        %2941 = vmatprep.subr.mxu0 0.0
        %2942 = vmatpush1.xpose.msra.mxu0 %v2879
        %2943 = vmatprep.subr.mxu0 0.0
        %2944 = vmatpush1.xpose.msra.mxu0 %v2876
        %2945 = vmatprep.subr.mxu0 0.0
        %2946 = vmatpush1.xpose.msra.mxu0 %v2873
        %2947 = vmatprep.subr.mxu0 0.0
        %2948 = vmatpush1.xpose.msra.mxu0 %v2870
        %2949 = vmatprep.subr.mxu0 0.0
        %2950 = vmatpush2.xpose.msra.mxu0 0.0
        %2951 = vmatprep.subr.mxu0 0.0
        %2952 = vmatpush2.xpose.msra.mxu0 0.0
        %2953 = vmatprep.subr.mxu0 0.0
        %2954 = vmatpush2.xpose.msra.mxu0 0.0
        %2955 = vmatprep.subr.mxu0 0.0
        %2956 = vmatpush2.xpose.msra.mxu0 0.0
        %2957 = vmatprep.subr.mxu0 0.0
        %2958 = vmatpush2.xpose.msra.mxu0 0.0
        %2959 = vmatprep.subr.mxu0 0.0
        %2960 = vmatpush2.xpose.msra.mxu0 0.0
        %2961 = vmatprep.subr.mxu0 0.0
        %2962 = vmatpush2.xpose.msra.mxu0 0.0
        %2963 = vmatprep.subr.mxu0 0.0
        %2964 = vmatpush2.xpose.msra.mxu0 0.0
        %2965 = vmatprep.subr.mxu0 0.0
        %2966 = vmatpush2.xpose.msra.mxu0 0.0
        %2967 = vmatprep.subr.mxu0 0.0
        %2968 = vmatpush2.xpose.msra.mxu0 0.0
        %2969 = vmatprep.subr.mxu0 0.0
        %2970 = vmatpush2.xpose.msra.mxu0 0.0
        %2971 = vmatprep.subr.mxu0 0.0
        %2972 = vmatpush2.xpose.msra.mxu0 0.0
        %2973 = vmatprep.subr.mxu0 0.0
        %2974 = vmatpush2.xpose.msra.mxu0 0.0
        %2975 = vmatprep.subr.mxu0 0.0
        %2976 = vmatpush2.xpose.msra.mxu0 0.0
        %2977 = vmatprep.subr.mxu0 0.0
        %2978 = vmatpush2.xpose.msra.mxu0 0.0
        %2979 = vmatprep.subr.mxu0 0.0
        %2980 = vmatpush2.xpose.msra.mxu0 0.0
        %2981 = vmatprep.mubr.f32.mxu0 0.0
        %2982 = vmatmul.mubr.f32.gmra.mxu0 %v2867
        %v2983 = vpop.f32.mrf.mxu0
        %v2984 = vadd.f32 %v2864, %v2983
        %v2985 = vpop.f32.mrf.mxu0
        %2986 = vdwg.mxu0
        %2987 = vst [vmem:[%s288] sm:$0x3] %v2984
        %s2988 = sand.u32 %s186, 1
        %s2989 = scalar_lea.sflag [#allocation3], %s2988
        %s2990 = sand.u32 %s186, 1
        %s2991 = smul.addr %s2990, 2
        %s2992 = scalar_lea.vmem [#allocation2], %s2991
        // Predicated region
        $region49: #{tpu_custom_call.1} parent=47 // pred_check
          %p2993 = pneg %p196
        $region50: #{tpu_custom_call.1} parent=47 // pred_check_branch
          %2995 = sbr.rel (%p2993) target = $region52
        $region51: #{tpu_custom_call.1} parent=47 // pred_region
          %s2997 = ssub.s32 32, 32
          %2998 = vsyncadd %s2989, %s2997
          %s2999 = smul.addr %s21, 32
          %s3000 = scalar_lea.hbm %s7, %s2999
          %s3002 = sshll.u32 %s2992, 4
          %s3003 = int_to_ptr.vmem [resolvable:$true] %s3002
          %3005 = dma.vmem_to_hbm [thread:$0]  %s3003, 32, %s3000, %s2989
        $region52: #{tpu_custom_call.1} parent=47 // pred_fallthru
          _
      $region48: #{tpu_custom_call.1} parent=5 // pred_fallthru
        _
      %p3006 = scmp.le.s32.totalorder 2, %s16
      // Predicated region
      $region53: #{tpu_custom_call.1} parent=5 // pred_check
        %p3007 = pneg %p3006
      $region54: #{tpu_custom_call.1} parent=5 // pred_check_branch
        %3009 = sbr.rel (%p3007) target = $region56
      $region55: #{tpu_custom_call.1} parent=5 // pred_region
        %s3010 = ssub.s32 %s16, 2
        // Predicated region
        $region57: #{tpu_custom_call.1} parent=55 // pred_check
          %p3011 = pneg %p202
        $region58: #{tpu_custom_call.1} parent=55 // pred_check_branch
          %3013 = sbr.rel (%p3011) target = $region60
        $region59: #{tpu_custom_call.1} parent=55 // pred_region
          %s3014 = sand.u32 %s187, 1
          %s3015 = scalar_lea.sflag [#allocation3], %s3014
          %s3016 = sand.u32 %s187, 1
          %s3017 = smul.addr %s3016, 2
          %s3018 = scalar_lea.vmem [#allocation2], %s3017
          %3019 = dma.done %s3015, 32
        $region60: #{tpu_custom_call.1} parent=55 // pred_fallthru
          _
      $region56: #{tpu_custom_call.1} parent=5 // pred_fallthru
        _
    $region6: #{tpu_custom_call.1} parent=1 // loop_footer
      %s20 = sadd.s32 1, %s16
    $region7: #{tpu_custom_call.1} parent=1 // loop_footer_branch
      %15 = sbr.rel target = $region3
    $region8: #{tpu_custom_call.1} parent=1 // loop_exit
      _
    %3020 = vsyncpa [#allocation3], 1
    %s3021 = scalar_lea.sflag [#allocation3], 1
    %3022 = vsyncpa %s3021, 1

</llo_original>
